<compile_context>
chip_gen: v7x
topology: tpu7x:2x2x1
jax: 0.10.0
libtpu: 0.0.40
codegen_flags: <defaults>
</compile_context>

<pallas_src>
import numpy as np
import jax
import jax.numpy as jnp
from jax import lax
from jax.experimental import pallas as pl
from jax.experimental.pallas import tpu as pltpu

B = 2            # batch
H0 = W0 = 10     # input spatial
C0 = 2           # input channels
S = 16           # fixed per-batch row stride (2 sublane tiles)

N1 = (B - 1) * S + 10   # rows carried after conv1  (valid rows: b*S + 0..9)
N2 = (B - 1) * S + 8    # rows carried after conv2  (valid rows: b*S + 0..7)
N3 = (B - 1) * S + 4    # rows carried after conv3  (valid rows: b*S + 0..3)
ND = (B - 1) * S + 1    # rows carried through the dense head (valid: b*S)


def _tree_sum(xs):
    """Pairwise-sum a list of arrays (breaks the serial accumulator chain)."""
    xs = list(xs)
    while len(xs) > 1:
        nxt = [xs[i] + xs[i + 1] for i in range(0, len(xs) - 1, 2)]
        if len(xs) % 2:
            nxt.append(xs[-1])
        xs = nxt
    return xs[0]


def cnn_kernel(x_ref, w1_ref, b1_ref, w2_ref, b2_ref, w3_ref, b3_ref,
               wd1_ref, bd1_ref, wd2_ref, bd2_ref, out_ref):
    x = x_ref[...]                                          # (B*16, 24) f32

    # ---- conv1 + relu : 3 per-tap banded matmuls on row-shifted views -------
    p1 = [jnp.dot(x[kh:kh + N1, :].astype(jnp.bfloat16), w1_ref[kh],
                  preferred_element_type=jnp.float32) for kh in range(3)]
    y1 = jnp.maximum(_tree_sum(p1) + b1_ref[...], 0.0)      # (26, 160) f32

    # ---- conv2 + relu --------------------------------------------------------
    p2 = [jnp.dot(y1[kh:kh + N2, :].astype(jnp.bfloat16), w2_ref[kh],
                  preferred_element_type=jnp.float32) for kh in range(3)]
    y2 = jnp.maximum(_tree_sum(p2) + b2_ref[...], 0.0)      # (24, 256) f32

    # ---- conv3 + relu : one fused-band matmul (lane-aligned concat) ----------
    lhs3 = jnp.concatenate([y2[kh:kh + N3, :] for kh in range(5)], axis=1)
    y3 = jnp.dot(lhs3.astype(jnp.bfloat16), w3_ref[...],     # (20,1280)@(1280,256)
                 preferred_element_type=jnp.float32)
    y3 = jnp.maximum(y3 + b3_ref[...], 0.0)                  # (20, 256) f32

    # ---- flatten + dense1 + relu : banded over the 4 conv3 output rows -------
    lhsd = jnp.concatenate([y3[h:h + ND, :] for h in range(4)], axis=1)  # (17,1024)
    h1 = jnp.dot(lhsd.astype(jnp.bfloat16), wd1_ref[...],
                 preferred_element_type=jnp.float32) + bd1_ref[...]
    h1 = jnp.maximum(h1, 0.0)                                # (17, 64) f32

    # ---- dense2 (lane-padded to 128) -----------------------------------------
    out_ref[...] = jnp.dot(h1.astype(jnp.bfloat16), wd2_ref[...],
                           preferred_element_type=jnp.float32) + bd2_ref[...]


@jax.jit
def cnn_forward(x, kp):
    """x: (B, 10, 10, 2) NHWC float32 -> (B, 4) float32."""
    # conv1's padding=1 plus the stride-16 row padding, done by XLA for free:
    # per-batch slot rows: [0]=pad, [1..10]=image, [11]=pad, [12..15]=zero.
    xpad = jnp.pad(x, ((0, 0), (1, 5), (1, 1), (0, 0)))      # (B, 16, 12, 2)
    x2d = xpad.reshape(B * S, 12 * C0)                       # (32, 24)

    vmem = lambda: pl.BlockSpec(memory_space=pltpu.MemorySpace.VMEM)
    out = pl.pallas_call(
        cnn_kernel,
        out_shape=jax.ShapeDtypeStruct((ND, 128), jnp.float32),
        in_specs=[vmem() for _ in range(11)],
        out_specs=vmem(),
    )(x2d, kp["w1"], kp["b1"], kp["w2"], kp["b2"], kp["w3"], kp["b3"],
      kp["wd1"], kp["bd1"], kp["wd2"], kp["bd2"])
    return out[::S, :4]                                      # rows {0,16} -> (B,4)


def _banded_conv_weight(w_oihw, win, wout):
    """(O,I,K,K) PyTorch conv weight -> (K, win*I, wout*O) banded weight so
    that, in the (rows, W*C) layout, out_rows = sum_kh shifted_rows @ band[kh]."""
    w = np.asarray(w_oihw, np.float32)
    o, i, k, _ = w.shape
    w_hwio = np.transpose(w, (2, 3, 1, 0))                   # (K, K, I, O)
    band = np.zeros((k, win * i, wout * o), np.float32)
    for kh in range(k):
        for kw in range(k):
            for wo in range(wout):
                band[kh, (wo + kw) * i:(wo + kw + 1) * i,
                     wo * o:(wo + 1) * o] = w_hwio[kh, kw]
    return band


def init_params(key):
    """Deterministic synthetic params: PyTorch layout + kernel-ready layout."""
    ks = jax.random.split(key, 10)
    s = 0.1
    pt = {
        "w1": jax.random.normal(ks[0], (16, 2, 3, 3), jnp.float32) * s,   # OIHW
        "b1": jax.random.normal(ks[1], (16,), jnp.float32) * s,
        "w2": jax.random.normal(ks[2], (32, 16, 3, 3), jnp.float32) * s,
        "b2": jax.random.normal(ks[3], (32,), jnp.float32) * s,
        "w3": jax.random.normal(ks[4], (64, 32, 5, 5), jnp.float32) * s,
        "b3": jax.random.normal(ks[5], (64,), jnp.float32) * s,
        "wd1": jax.random.normal(ks[6], (64, 1024), jnp.float32) * s,     # (out, C*H*W)
        "bd1": jax.random.normal(ks[7], (64,), jnp.float32) * s,
        "wd2": jax.random.normal(ks[8], (4, 64), jnp.float32) * s,
        "bd2": jax.random.normal(ks[9], (4,), jnp.float32) * s,
    }
    # dense1 weight: (out, C*H*W) -> (H*W*C, out) so our HWC flatten matches
    # PyTorch's CHW flatten.
    wd1_hwc = np.transpose(np.asarray(pt["wd1"]).reshape(64, 64, 4, 4),
                           (2, 3, 1, 0)).reshape(1024, 64)
    # dense2 weight/bias lane-padded to 128 so the final store is unmasked.
    wd2_pad = np.zeros((64, 128), np.float32)
    wd2_pad[:, :4] = np.asarray(pt["wd2"]).T
    bd2_pad = np.zeros((1, 128), np.float32)
    bd2_pad[0, :4] = np.asarray(pt["bd2"])
    kp = {
        # conv1/conv2: per-tap bands (K, win*cin, wout*cout)
        "w1": jnp.asarray(_banded_conv_weight(pt["w1"], 12, 10), jnp.bfloat16),
        "w2": jnp.asarray(_banded_conv_weight(pt["w2"], 10, 8), jnp.bfloat16),
        # conv3: fused band stacked along the contraction dim (K*win*cin, wout*cout)
        "w3": jnp.asarray(_banded_conv_weight(pt["w3"], 8, 4).reshape(5 * 256, 256),
                          jnp.bfloat16),
        "b1": jnp.asarray(np.tile(np.asarray(pt["b1"]), 10)[None, :]),    # (1,160)
        "b2": jnp.asarray(np.tile(np.asarray(pt["b2"]), 8)[None, :]),     # (1,256)
        "b3": jnp.asarray(np.tile(np.asarray(pt["b3"]), 4)[None, :]),     # (1,256)
        "wd1": jnp.asarray(wd1_hwc, jnp.bfloat16),                        # (1024,64)
        "bd1": jnp.asarray(pt["bd1"]).reshape(1, 64),
        "wd2": jnp.asarray(wd2_pad, jnp.bfloat16),                        # (64,128)
        "bd2": jnp.asarray(bd2_pad),                                      # (1,128)
    }
    return pt, kp


def ref_forward(x, pt):
    """Pure-JAX f32 reference mirroring the PyTorch forward (NCHW)."""
    dn = ("NCHW", "OIHW", "NCHW")
    y = jnp.transpose(x, (0, 3, 1, 2))
    y = lax.conv_general_dilated(y, pt["w1"], (1, 1), ((1, 1), (1, 1)),
                                 dimension_numbers=dn)
    y = jnp.maximum(y + pt["b1"][None, :, None, None], 0.0)
    y = lax.conv_general_dilated(y, pt["w2"], (1, 1), "VALID",
                                 dimension_numbers=dn)
    y = jnp.maximum(y + pt["b2"][None, :, None, None], 0.0)
    y = lax.conv_general_dilated(y, pt["w3"], (1, 1), "VALID",
                                 dimension_numbers=dn)
    y = jnp.maximum(y + pt["b3"][None, :, None, None], 0.0)
    flat = y.reshape(y.shape[0], -1)                 # CHW flatten, like PyTorch
    h = jnp.maximum(flat @ pt["wd1"].T + pt["bd1"], 0.0)
    return h @ pt["wd2"].T + pt["bd2"]


if __name__ == "__main__":
    key = jax.random.PRNGKey(0)
    kx, kparams = jax.random.split(key)
    x = jax.random.normal(kx, (B, H0, W0, C0), jnp.float32)
    pt, kp = init_params(kparams)

    out = jax.block_until_ready(cnn_forward(x, kp))
    ref = jax.block_until_ready(ref_forward(x, pt))

    assert out.shape == (B, 4), out.shape
    assert bool(jnp.all(jnp.isfinite(out)))
    assert bool(jnp.allclose(out, ref, atol=5e-2, rtol=5e-2)), (out, ref)

    print("KERNEL_OK")
</pallas_src>

<mosaic_0001>
module attributes {stable_mosaic.version = 11 : i64} {
  func.func @cnn_kernel(%arg0: memref<32x24xf32, #tpu.memory_space<vmem>>, %arg1: memref<3x24x160xbf16, #tpu.memory_space<vmem>>, %arg2: memref<1x160xf32, #tpu.memory_space<vmem>>, %arg3: memref<3x160x256xbf16, #tpu.memory_space<vmem>>, %arg4: memref<1x256xf32, #tpu.memory_space<vmem>>, %arg5: memref<1280x256xbf16, #tpu.memory_space<vmem>>, %arg6: memref<1x256xf32, #tpu.memory_space<vmem>>, %arg7: memref<1024x64xbf16, #tpu.memory_space<vmem>>, %arg8: memref<1x64xf32, #tpu.memory_space<vmem>>, %arg9: memref<64x128xbf16, #tpu.memory_space<vmem>>, %arg10: memref<1x128xf32, #tpu.memory_space<vmem>>, %arg11: memref<17x128xf32, #tpu.memory_space<vmem>>) attributes {dimension_semantics = [], scalar_prefetch = 0 : i64, scratch_operands = 0 : i64, tpu.core_type = #tpu.core_type<tc>} {
    %c0 = arith.constant 0 : index
    %c0_0 = arith.constant 0 : index
    %0 = vector.load %arg0[%c0, %c0_0] : memref<32x24xf32, #tpu.memory_space<vmem>>, vector<32x24xf32>
    %1 = vector.extract_strided_slice %0 {offsets = [0, 0], sizes = [26, 24], strides = [1, 1]} : vector<32x24xf32> to vector<26x24xf32>
    %2 = arith.truncf %1 : vector<26x24xf32> to vector<26x24xbf16>
    %c0_1 = arith.constant 0 : index
    %c0_2 = arith.constant 0 : index
    %c0_3 = arith.constant 0 : index
    %3 = vector.load %arg1[%c0_1, %c0_2, %c0_3] : memref<3x24x160xbf16, #tpu.memory_space<vmem>>, vector<1x24x160xbf16>
    %4 = vector.shape_cast %3 : vector<1x24x160xbf16> to vector<24x160xbf16>
    %cst = arith.constant dense<0.000000e+00> : vector<26x160xf32>
    %5 = tpu.matmul %2, %4, %cst {dimension_numbers = #tpu.dot_dimension_numbers<[1], [0], [0], [1], [0, 0, 1, 1], [], []>} : vector<26x24xbf16>, vector<24x160xbf16>, vector<26x160xf32> -> vector<26x160xf32>
    %6 = vector.extract_strided_slice %0 {offsets = [1, 0], sizes = [26, 24], strides = [1, 1]} : vector<32x24xf32> to vector<26x24xf32>
    %7 = arith.truncf %6 : vector<26x24xf32> to vector<26x24xbf16>
    %c1 = arith.constant 1 : index
    %c0_4 = arith.constant 0 : index
    %c0_5 = arith.constant 0 : index
    %8 = vector.load %arg1[%c1, %c0_4, %c0_5] : memref<3x24x160xbf16, #tpu.memory_space<vmem>>, vector<1x24x160xbf16>
    %9 = vector.shape_cast %8 : vector<1x24x160xbf16> to vector<24x160xbf16>
    %cst_6 = arith.constant dense<0.000000e+00> : vector<26x160xf32>
    %10 = tpu.matmul %7, %9, %cst_6 {dimension_numbers = #tpu.dot_dimension_numbers<[1], [0], [0], [1], [0, 0, 1, 1], [], []>} : vector<26x24xbf16>, vector<24x160xbf16>, vector<26x160xf32> -> vector<26x160xf32>
    %11 = vector.extract_strided_slice %0 {offsets = [2, 0], sizes = [26, 24], strides = [1, 1]} : vector<32x24xf32> to vector<26x24xf32>
    %12 = arith.truncf %11 : vector<26x24xf32> to vector<26x24xbf16>
    %c2 = arith.constant 2 : index
    %c0_7 = arith.constant 0 : index
    %c0_8 = arith.constant 0 : index
    %13 = vector.load %arg1[%c2, %c0_7, %c0_8] : memref<3x24x160xbf16, #tpu.memory_space<vmem>>, vector<1x24x160xbf16>
    %14 = vector.shape_cast %13 : vector<1x24x160xbf16> to vector<24x160xbf16>
    %cst_9 = arith.constant dense<0.000000e+00> : vector<26x160xf32>
    %15 = tpu.matmul %12, %14, %cst_9 {dimension_numbers = #tpu.dot_dimension_numbers<[1], [0], [0], [1], [0, 0, 1, 1], [], []>} : vector<26x24xbf16>, vector<24x160xbf16>, vector<26x160xf32> -> vector<26x160xf32>
    %16 = arith.addf %5, %10 : vector<26x160xf32>
    %17 = arith.addf %16, %15 : vector<26x160xf32>
    %c0_10 = arith.constant 0 : index
    %c0_11 = arith.constant 0 : index
    %18 = vector.load %arg2[%c0_10, %c0_11] : memref<1x160xf32, #tpu.memory_space<vmem>>, vector<1x160xf32>
    %19 = vector.broadcast %18 : vector<1x160xf32> to vector<26x160xf32>
    %20 = arith.addf %17, %19 : vector<26x160xf32>
    %cst_12 = arith.constant 0.000000e+00 : f32
    %21 = vector.broadcast %cst_12 : f32 to vector<26x160xf32>
    %22 = arith.maximumf %20, %21 : vector<26x160xf32>
    %23 = vector.extract_strided_slice %22 {offsets = [0, 0], sizes = [24, 160], strides = [1, 1]} : vector<26x160xf32> to vector<24x160xf32>
    %24 = arith.truncf %23 : vector<24x160xf32> to vector<24x160xbf16>
    %c0_13 = arith.constant 0 : index
    %c0_14 = arith.constant 0 : index
    %c0_15 = arith.constant 0 : index
    %25 = vector.load %arg3[%c0_13, %c0_14, %c0_15] : memref<3x160x256xbf16, #tpu.memory_space<vmem>>, vector<1x160x256xbf16>
    %26 = vector.shape_cast %25 : vector<1x160x256xbf16> to vector<160x256xbf16>
    %cst_16 = arith.constant dense<0.000000e+00> : vector<24x256xf32>
    %27 = tpu.matmul %24, %26, %cst_16 {dimension_numbers = #tpu.dot_dimension_numbers<[1], [0], [0], [1], [0, 0, 1, 1], [], []>} : vector<24x160xbf16>, vector<160x256xbf16>, vector<24x256xf32> -> vector<24x256xf32>
    %28 = vector.extract_strided_slice %22 {offsets = [1, 0], sizes = [24, 160], strides = [1, 1]} : vector<26x160xf32> to vector<24x160xf32>
    %29 = arith.truncf %28 : vector<24x160xf32> to vector<24x160xbf16>
    %c1_17 = arith.constant 1 : index
    %c0_18 = arith.constant 0 : index
    %c0_19 = arith.constant 0 : index
    %30 = vector.load %arg3[%c1_17, %c0_18, %c0_19] : memref<3x160x256xbf16, #tpu.memory_space<vmem>>, vector<1x160x256xbf16>
    %31 = vector.shape_cast %30 : vector<1x160x256xbf16> to vector<160x256xbf16>
    %cst_20 = arith.constant dense<0.000000e+00> : vector<24x256xf32>
    %32 = tpu.matmul %29, %31, %cst_20 {dimension_numbers = #tpu.dot_dimension_numbers<[1], [0], [0], [1], [0, 0, 1, 1], [], []>} : vector<24x160xbf16>, vector<160x256xbf16>, vector<24x256xf32> -> vector<24x256xf32>
    %33 = vector.extract_strided_slice %22 {offsets = [2, 0], sizes = [24, 160], strides = [1, 1]} : vector<26x160xf32> to vector<24x160xf32>
    %34 = arith.truncf %33 : vector<24x160xf32> to vector<24x160xbf16>
    %c2_21 = arith.constant 2 : index
    %c0_22 = arith.constant 0 : index
    %c0_23 = arith.constant 0 : index
    %35 = vector.load %arg3[%c2_21, %c0_22, %c0_23] : memref<3x160x256xbf16, #tpu.memory_space<vmem>>, vector<1x160x256xbf16>
    %36 = vector.shape_cast %35 : vector<1x160x256xbf16> to vector<160x256xbf16>
    %cst_24 = arith.constant dense<0.000000e+00> : vector<24x256xf32>
    %37 = tpu.matmul %34, %36, %cst_24 {dimension_numbers = #tpu.dot_dimension_numbers<[1], [0], [0], [1], [0, 0, 1, 1], [], []>} : vector<24x160xbf16>, vector<160x256xbf16>, vector<24x256xf32> -> vector<24x256xf32>
    %38 = arith.addf %27, %32 : vector<24x256xf32>
    %39 = arith.addf %38, %37 : vector<24x256xf32>
    %c0_25 = arith.constant 0 : index
    %c0_26 = arith.constant 0 : index
    %40 = vector.load %arg4[%c0_25, %c0_26] : memref<1x256xf32, #tpu.memory_space<vmem>>, vector<1x256xf32>
    %41 = vector.broadcast %40 : vector<1x256xf32> to vector<24x256xf32>
    %42 = arith.addf %39, %41 : vector<24x256xf32>
    %cst_27 = arith.constant 0.000000e+00 : f32
    %43 = vector.broadcast %cst_27 : f32 to vector<24x256xf32>
    %44 = arith.maximumf %42, %43 : vector<24x256xf32>
    %45 = vector.extract_strided_slice %44 {offsets = [0, 0], sizes = [20, 256], strides = [1, 1]} : vector<24x256xf32> to vector<20x256xf32>
    %46 = vector.extract_strided_slice %44 {offsets = [1, 0], sizes = [20, 256], strides = [1, 1]} : vector<24x256xf32> to vector<20x256xf32>
    %47 = vector.extract_strided_slice %44 {offsets = [2, 0], sizes = [20, 256], strides = [1, 1]} : vector<24x256xf32> to vector<20x256xf32>
    %48 = vector.extract_strided_slice %44 {offsets = [3, 0], sizes = [20, 256], strides = [1, 1]} : vector<24x256xf32> to vector<20x256xf32>
    %49 = vector.extract_strided_slice %44 {offsets = [4, 0], sizes = [20, 256], strides = [1, 1]} : vector<24x256xf32> to vector<20x256xf32>
    %50 = tpu.concatenate %45, %46, %47, %48, %49 in 1 : vector<20x256xf32>, vector<20x256xf32>, vector<20x256xf32>, vector<20x256xf32>, vector<20x256xf32> -> vector<20x1280xf32>
    %51 = arith.truncf %50 : vector<20x1280xf32> to vector<20x1280xbf16>
    %c0_28 = arith.constant 0 : index
    %c0_29 = arith.constant 0 : index
    %52 = vector.load %arg5[%c0_28, %c0_29] : memref<1280x256xbf16, #tpu.memory_space<vmem>>, vector<1280x256xbf16>
    %cst_30 = arith.constant dense<0.000000e+00> : vector<20x256xf32>
    %53 = tpu.matmul %51, %52, %cst_30 {dimension_numbers = #tpu.dot_dimension_numbers<[1], [0], [0], [1], [0, 0, 1, 1], [], []>} : vector<20x1280xbf16>, vector<1280x256xbf16>, vector<20x256xf32> -> vector<20x256xf32>
    %c0_31 = arith.constant 0 : index
    %c0_32 = arith.constant 0 : index
    %54 = vector.load %arg6[%c0_31, %c0_32] : memref<1x256xf32, #tpu.memory_space<vmem>>, vector<1x256xf32>
    %55 = vector.broadcast %54 : vector<1x256xf32> to vector<20x256xf32>
    %56 = arith.addf %53, %55 : vector<20x256xf32>
    %cst_33 = arith.constant 0.000000e+00 : f32
    %57 = vector.broadcast %cst_33 : f32 to vector<20x256xf32>
    %58 = arith.maximumf %56, %57 : vector<20x256xf32>
    %59 = vector.extract_strided_slice %58 {offsets = [0, 0], sizes = [17, 256], strides = [1, 1]} : vector<20x256xf32> to vector<17x256xf32>
    %60 = vector.extract_strided_slice %58 {offsets = [1, 0], sizes = [17, 256], strides = [1, 1]} : vector<20x256xf32> to vector<17x256xf32>
    %61 = vector.extract_strided_slice %58 {offsets = [2, 0], sizes = [17, 256], strides = [1, 1]} : vector<20x256xf32> to vector<17x256xf32>
    %62 = vector.extract_strided_slice %58 {offsets = [3, 0], sizes = [17, 256], strides = [1, 1]} : vector<20x256xf32> to vector<17x256xf32>
    %63 = tpu.concatenate %59, %60, %61, %62 in 1 : vector<17x256xf32>, vector<17x256xf32>, vector<17x256xf32>, vector<17x256xf32> -> vector<17x1024xf32>
    %64 = arith.truncf %63 : vector<17x1024xf32> to vector<17x1024xbf16>
    %c0_34 = arith.constant 0 : index
    %c0_35 = arith.constant 0 : index
    %65 = vector.load %arg7[%c0_34, %c0_35] : memref<1024x64xbf16, #tpu.memory_space<vmem>>, vector<1024x64xbf16>
    %cst_36 = arith.constant dense<0.000000e+00> : vector<17x64xf32>
    %66 = tpu.matmul %64, %65, %cst_36 {dimension_numbers = #tpu.dot_dimension_numbers<[1], [0], [0], [1], [0, 0, 1, 1], [], []>} : vector<17x1024xbf16>, vector<1024x64xbf16>, vector<17x64xf32> -> vector<17x64xf32>
    %c0_37 = arith.constant 0 : index
    %c0_38 = arith.constant 0 : index
    %67 = vector.load %arg8[%c0_37, %c0_38] : memref<1x64xf32, #tpu.memory_space<vmem>>, vector<1x64xf32>
    %68 = vector.broadcast %67 : vector<1x64xf32> to vector<17x64xf32>
    %69 = arith.addf %66, %68 : vector<17x64xf32>
    %cst_39 = arith.constant 0.000000e+00 : f32
    %70 = vector.broadcast %cst_39 : f32 to vector<17x64xf32>
    %71 = arith.maximumf %69, %70 : vector<17x64xf32>
    %72 = arith.truncf %71 : vector<17x64xf32> to vector<17x64xbf16>
    %c0_40 = arith.constant 0 : index
    %c0_41 = arith.constant 0 : index
    %73 = vector.load %arg9[%c0_40, %c0_41] : memref<64x128xbf16, #tpu.memory_space<vmem>>, vector<64x128xbf16>
    %cst_42 = arith.constant dense<0.000000e+00> : vector<17x128xf32>
    %74 = tpu.matmul %72, %73, %cst_42 {dimension_numbers = #tpu.dot_dimension_numbers<[1], [0], [0], [1], [0, 0, 1, 1], [], []>} : vector<17x64xbf16>, vector<64x128xbf16>, vector<17x128xf32> -> vector<17x128xf32>
    %c0_43 = arith.constant 0 : index
    %c0_44 = arith.constant 0 : index
    %75 = vector.load %arg10[%c0_43, %c0_44] : memref<1x128xf32, #tpu.memory_space<vmem>>, vector<1x128xf32>
    %76 = vector.broadcast %75 : vector<1x128xf32> to vector<17x128xf32>
    %77 = arith.addf %74, %76 : vector<17x128xf32>
    %c0_45 = arith.constant 0 : index
    %c0_46 = arith.constant 0 : index
    %78 = vector.load %arg11[%c0_45, %c0_46] : memref<17x128xf32, #tpu.memory_space<vmem>>, vector<17x128xf32>
    tpu.vector_store %arg11[%c0_45, %c0_46], %77 {strides = array<i32>} : memref<17x128xf32, #tpu.memory_space<vmem>>, vector<17x128xf32>,
    return
  }
}

</mosaic_0001>

<llo_original>
// kernel: cnn_forward.1
$region0: #{cnn_forward.1}
  #allocation0 [shape = 'u32[]', space=smem, size = 0x4, offset = 0x4, fixed_abs, tag = 'smem constant byte address 0x4 - core index']
  #allocation1 [shape = 'u32[144,128]{1,0:T(1,128)}', space=vmem, size = 0x12000, scoped, tag = 'internal scratch']
  %s0 = inlined_call_operand.vmem [shape: f32[32,24], index: 0, kind: input, shape index: {}]
  %s1 = inlined_call_operand.vmem [shape: bf16[3,24,160], index: 1, kind: input, shape index: {}]
  %s2 = inlined_call_operand.vmem [shape: f32[1,160], index: 2, kind: input, shape index: {}]
  %s3 = inlined_call_operand.vmem [shape: bf16[3,160,256], index: 3, kind: input, shape index: {}]
  %s4 = inlined_call_operand.vmem [shape: f32[1,256], index: 4, kind: input, shape index: {}]
  %s5 = inlined_call_operand.hbm [shape: bf16[1280,256], index: 5, kind: input, shape index: {}]
  %s6 = inlined_call_operand.vmem [shape: f32[1,256], index: 6, kind: input, shape index: {}]
  %s7 = inlined_call_operand.vmem [shape: bf16[1024,64], index: 7, kind: input, shape index: {}]
  %s8 = inlined_call_operand.vmem [shape: f32[1,64], index: 8, kind: input, shape index: {}]
  %s9 = inlined_call_operand.vmem [shape: bf16[64,128], index: 9, kind: input, shape index: {}]
  %s10 = inlined_call_operand.vmem [shape: f32[1,128], index: 10, kind: input, shape index: {}]
  %s11 = inlined_call_operand.vmem [shape: f32[17,128], index: 11, kind: output, shape index: {}]
  %s12 = sld [smem:[#allocation0]]
  $region58: #{cnn_forward.1} parent=0
    _
  %s14 = ssub.s32 1, %s12
  %s15 = scalar_select 0, %s14, %s12
  $region1: #{cnn_forward.1} parent=0
    #allocation2 [shape = 'u8[655360]{0}', space=vmem, size = 0xa0000, scoped, tag = 'input window, operand 5, single buffered']
    #allocation3 [shape = 's32[1]{0}', space=sflag, size = 0x4, scoped, tag = 'scoped memory for cnn_forward.1']
    %16 = vsyncpa [#allocation3], 0
    // Predicated region
    $region2: #{cnn_forward.1} parent=1 // pred_check
      _
    $region3: #{cnn_forward.1} parent=1 // pred_check_branch
      %18 = sbr.rel (0) target = $region5
    $region4: #{cnn_forward.1} parent=1 // pred_region
      _
    $region5: #{cnn_forward.1} parent=1 // pred_fallthru
      _
    // Predicated region
    $region6: #{cnn_forward.1} parent=1 // pred_check
      _
    $region7: #{cnn_forward.1} parent=1 // pred_check_branch
      %20 = sbr.rel (0) target = $region9
    $region8: #{cnn_forward.1} parent=1 // pred_region
      _
    $region9: #{cnn_forward.1} parent=1 // pred_fallthru
      _
    // Predicated region
    $region10: #{cnn_forward.1} parent=1 // pred_check
      _
    $region11: #{cnn_forward.1} parent=1 // pred_check_branch
      %22 = sbr.rel (0) target = $region13
    $region12: #{cnn_forward.1} parent=1 // pred_region
      _
    $region13: #{cnn_forward.1} parent=1 // pred_fallthru
      _
    // Predicated region
    $region14: #{cnn_forward.1} parent=1 // pred_check
      _
    $region15: #{cnn_forward.1} parent=1 // pred_check_branch
      %24 = sbr.rel (0) target = $region17
    $region16: #{cnn_forward.1} parent=1 // pred_region
      _
    $region17: #{cnn_forward.1} parent=1 // pred_fallthru
      _
    // Predicated region
    $region18: #{cnn_forward.1} parent=1 // pred_check
      _
    $region19: #{cnn_forward.1} parent=1 // pred_check_branch
      %26 = sbr.rel (0) target = $region21
    $region20: #{cnn_forward.1} parent=1 // pred_region
      _
    $region21: #{cnn_forward.1} parent=1 // pred_fallthru
      _
    // Predicated region
    $region22: #{cnn_forward.1} parent=1 // pred_check
      _
    $region23: #{cnn_forward.1} parent=1 // pred_check_branch
      %28 = sbr.rel (0) target = $region25
    $region24: #{cnn_forward.1} parent=1 // pred_region
      %s30 = ssub.s32 20480, 20480
      %31 = vsyncadd [#allocation3], %s30
      %s32 = sshll.u32 [#allocation2], 4
      %s33 = int_to_ptr.vmem [resolvable:$true] %s32
      %38 = dma.hbm_to_vmem [thread:$0]  %s5, 20480, %s33, [#allocation3], 128, 128, 8
    $region25: #{cnn_forward.1} parent=1 // pred_fallthru
      _
    // Predicated region
    $region26: #{cnn_forward.1} parent=1 // pred_check
      _
    $region27: #{cnn_forward.1} parent=1 // pred_check_branch
      %40 = sbr.rel (0) target = $region29
    $region28: #{cnn_forward.1} parent=1 // pred_region
      _
    $region29: #{cnn_forward.1} parent=1 // pred_fallthru
      _
    // Predicated region
    $region30: #{cnn_forward.1} parent=1 // pred_check
      _
    $region31: #{cnn_forward.1} parent=1 // pred_check_branch
      %42 = sbr.rel (0) target = $region33
    $region32: #{cnn_forward.1} parent=1 // pred_region
      _
    $region33: #{cnn_forward.1} parent=1 // pred_fallthru
      _
    // Predicated region
    $region34: #{cnn_forward.1} parent=1 // pred_check
      _
    $region35: #{cnn_forward.1} parent=1 // pred_check_branch
      %44 = sbr.rel (0) target = $region37
    $region36: #{cnn_forward.1} parent=1 // pred_region
      _
    $region37: #{cnn_forward.1} parent=1 // pred_fallthru
      _
    // Predicated region
    $region38: #{cnn_forward.1} parent=1 // pred_check
      _
    $region39: #{cnn_forward.1} parent=1 // pred_check_branch
      %46 = sbr.rel (0) target = $region41
    $region40: #{cnn_forward.1} parent=1 // pred_region
      _
    $region41: #{cnn_forward.1} parent=1 // pred_fallthru
      _
    // Predicated region
    $region42: #{cnn_forward.1} parent=1 // pred_check
      _
    $region43: #{cnn_forward.1} parent=1 // pred_check_branch
      %48 = sbr.rel (0) target = $region45
    $region44: #{cnn_forward.1} parent=1 // pred_region
      _
    $region45: #{cnn_forward.1} parent=1 // pred_fallthru
      _
    // Predicated region
    $region46: #{cnn_forward.1} parent=1 // pred_check
      _
    $region47: #{cnn_forward.1} parent=1 // pred_check_branch
      %50 = sbr.rel (0) target = $region49
    $region48: #{cnn_forward.1} parent=1 // pred_region
      %51 = dma.done [#allocation3], 20480
    $region49: #{cnn_forward.1} parent=1 // pred_fallthru
      _
    %v53 = vld [vmem:[%s0] sm:$0xff]
    %v54 = vld [vmem:[%s0 + $0x8] sm:$0xff]
    %v55 = vld [vmem:[%s0 + $0x10] sm:$0xff]
    %v56 = vld [vmem:[%s0 + $0x18] sm:$0xff]
    %v57 = vpack.c.bf16 %v54, %v53
    %v58 = vpack.c.bf16 %v56, %v55
    %v59 = vld [vmem:[%s1] sm:$0xff]
    %v60 = vld [vmem:[%s1 + $0x8] sm:$0xff]
    %v61 = vld [vmem:[%s1 + $0x10] sm:$0xff]
    %s62 = scalar_lea.vmem %s1, 24
    %v63 = vld [vmem:[%s62] sm:$0xff]
    %v64 = vld [vmem:[%s62 + $0x8] sm:$0xff]
    %v65 = vld [vmem:[%s62 + $0x10] sm:$0xff]
    %vm66 = vsmask.f32 7424
    %v68 = vshrl.u32 %v57, 16
    %v70 = vshll.u32 %v57, 16
    %v72 = vrot.slane %v70, 1
    %v73 = vor.u32 %v68, %v72
    %v75 = vshll.u32 %v58, 16
    %v77 = vrot.slane %v75, 1
    %v78 = vsel %vm66, %v73, %v77
    %v79 = vshrl.u32 %v58, 16
    %v81 = vor.u32 %v79, %v77
    %v85 = vunpack.c.l.b16 %v63
    %v86 = vunpack.c.h.b16 %v63
    %v87 = vunpack.c.l.b16 %v64
    %v88 = vunpack.c.h.b16 %v64
    %v89 = vunpack.c.l.b16 %v65
    %v90 = vunpack.c.h.b16 %v65
    %v91 = vpack.c.b16 %v87, %v85
    %v92 = vpack.c.b16 %v88, %v86
    %v93 = vpack.c.b16 %v89, %v89
    %v94 = vpack.c.b16 %v90, %v90
    %vm97 = vcmask 195584
    %v99 = vsel %vm97, %v78, 0
    %v102 = vsel %vm97, %v81, 0
    %vm104 = vcmask 1043456
    %v106 = vsel %vm104, %v93, 0
    %v109 = vsel %vm104, %v94, 0
    %111 = vmatprep.subr.bf16.mxu0 %v92
    %112 = vmatpush1.bf16.msra.mxu0 %v91
    %113 = vmatprep.subr.bf16.mxu0 %v109
    %114 = vmatpush1.bf16.msra.mxu0 %v106
    %115 = vmatprep.subr.bf16.mxu0 0
    %116 = vmatpush1.bf16.msra.mxu0 0
    %117 = vmatprep.subr.bf16.mxu0 0
    %118 = vmatpush1.bf16.msra.mxu0 0
    %119 = vmatprep.subr.bf16.mxu0 0
    %120 = vmatpush1.bf16.msra.mxu0 0
    %121 = vmatprep.subr.bf16.mxu0 0
    %122 = vmatpush1.bf16.msra.mxu0 0
    %123 = vmatprep.subr.bf16.mxu0 0
    %124 = vmatpush1.bf16.msra.mxu0 0
    %125 = vmatprep.subr.bf16.mxu0 0
    %126 = vmatpush1.bf16.msra.mxu0 0
    %127 = vmatprep.subr.bf16.mxu0 0
    %128 = vmatpush1.bf16.msra.mxu0 0
    %129 = vmatprep.subr.bf16.mxu0 0
    %130 = vmatpush1.bf16.msra.mxu0 0
    %131 = vmatprep.subr.bf16.mxu0 0
    %132 = vmatpush1.bf16.msra.mxu0 0
    %133 = vmatprep.subr.bf16.mxu0 0
    %134 = vmatpush1.bf16.msra.mxu0 0
    %135 = vmatprep.subr.bf16.mxu0 0
    %136 = vmatpush1.bf16.msra.mxu0 0
    %137 = vmatprep.subr.bf16.mxu0 0
    %138 = vmatpush1.bf16.msra.mxu0 0
    %139 = vmatprep.subr.bf16.mxu0 0
    %140 = vmatpush1.bf16.msra.mxu0 0
    %141 = vmatprep.subr.bf16.mxu0 0
    %142 = vmatpush1.bf16.msra.mxu0 0
    %143 = vmatprep.mubr.bf16.mxu0 0
    %144 = vmatmul.mubr.bf16.gmra.mrb[0].mxu0 %v99
    %v145 = vpop.f32.mrb[0].mxu0
    %v146 = vadd.f32 0.0, %v145
    %v147 = vpop.f32.mrb[0].mxu0
    %v148 = vadd.f32 0.0, %v147
    %v149 = vpop.f32.mrb[0].mxu0
    %v150 = vadd.f32 0.0, %v149
    %v151 = vpop.f32.mrb[0].mxu0
    %v152 = vadd.f32 0.0, %v151
    %153 = vmatprep.mubr.bf16.mxu0 0
    %154 = vmatmul.mubr.bf16.gmra.mrb[0].mxu0 %v102
    %v155 = vpop.f32.mrb[0].mxu0
    %v156 = vadd.f32 0.0, %v155
    %v157 = vpop.f32.mrb[0].mxu0
    %v158 = vadd.f32 0.0, %v157
    %v159 = vpop.f32.mrb[0].mxu0
    %v160 = vadd.f32 0.0, %v159
    %v161 = vpop.f32.mrb[0].mxu0
    %v162 = vadd.f32 0.0, %v161
    %163 = vdwg.mxu0
    %s164 = scalar_lea.vmem %s1, 48
    %v165 = vld [vmem:[%s164] sm:$0xff]
    %v166 = vld [vmem:[%s164 + $0x8] sm:$0xff]
    %v167 = vld [vmem:[%s164 + $0x10] sm:$0xff]
    %vm170 = vcmask 1046528
    %v171 = vrot.slane %v57, 1
    %v172 = vrot.slane %v58, 1
    %v173 = vsel %vm170, %v171, %v172
    %v177 = vunpack.c.l.b16 %v165
    %v178 = vunpack.c.h.b16 %v165
    %v179 = vunpack.c.l.b16 %v166
    %v180 = vunpack.c.h.b16 %v166
    %v181 = vunpack.c.l.b16 %v167
    %v182 = vunpack.c.h.b16 %v167
    %v183 = vpack.c.b16 %v179, %v177
    %v184 = vpack.c.b16 %v180, %v178
    %v185 = vpack.c.b16 %v181, %v181
    %v186 = vpack.c.b16 %v182, %v182
    %v190 = vsel %vm97, %v173, 0
    %v193 = vsel %vm97, %v172, 0
    %v196 = vsel %vm104, %v185, 0
    %v199 = vsel %vm104, %v186, 0
    %201 = vmatprep.subr.bf16.mxu0 %v184
    %202 = vmatpush1.bf16.msra.mxu0 %v183
    %203 = vmatprep.subr.bf16.mxu0 %v199
    %204 = vmatpush1.bf16.msra.mxu0 %v196
    %205 = vmatprep.subr.bf16.mxu0 0
    %206 = vmatpush1.bf16.msra.mxu0 0
    %207 = vmatprep.subr.bf16.mxu0 0
    %208 = vmatpush1.bf16.msra.mxu0 0
    %209 = vmatprep.subr.bf16.mxu0 0
    %210 = vmatpush1.bf16.msra.mxu0 0
    %211 = vmatprep.subr.bf16.mxu0 0
    %212 = vmatpush1.bf16.msra.mxu0 0
    %213 = vmatprep.subr.bf16.mxu0 0
    %214 = vmatpush1.bf16.msra.mxu0 0
    %215 = vmatprep.subr.bf16.mxu0 0
    %216 = vmatpush1.bf16.msra.mxu0 0
    %217 = vmatprep.subr.bf16.mxu0 0
    %218 = vmatpush1.bf16.msra.mxu0 0
    %219 = vmatprep.subr.bf16.mxu0 0
    %220 = vmatpush1.bf16.msra.mxu0 0
    %221 = vmatprep.subr.bf16.mxu0 0
    %222 = vmatpush1.bf16.msra.mxu0 0
    %223 = vmatprep.subr.bf16.mxu0 0
    %224 = vmatpush1.bf16.msra.mxu0 0
    %225 = vmatprep.subr.bf16.mxu0 0
    %226 = vmatpush1.bf16.msra.mxu0 0
    %227 = vmatprep.subr.bf16.mxu0 0
    %228 = vmatpush1.bf16.msra.mxu0 0
    %229 = vmatprep.subr.bf16.mxu0 0
    %230 = vmatpush1.bf16.msra.mxu0 0
    %231 = vmatprep.subr.bf16.mxu0 0
    %232 = vmatpush1.bf16.msra.mxu0 0
    %233 = vmatprep.mubr.bf16.mxu0 0
    %234 = vmatmul.mubr.bf16.gmra.mrb[0].mxu0 %v190
    %v235 = vpop.f32.mrb[0].mxu0
    %v236 = vadd.f32 0.0, %v235
    %v237 = vpop.f32.mrb[0].mxu0
    %v238 = vadd.f32 0.0, %v237
    %v239 = vpop.f32.mrb[0].mxu0
    %v240 = vadd.f32 0.0, %v239
    %v241 = vpop.f32.mrb[0].mxu0
    %v242 = vadd.f32 0.0, %v241
    %243 = vmatprep.mubr.bf16.mxu0 0
    %244 = vmatmul.mubr.bf16.gmra.mrb[0].mxu0 %v193
    %v245 = vpop.f32.mrb[0].mxu0
    %v246 = vadd.f32 0.0, %v245
    %v247 = vpop.f32.mrb[0].mxu0
    %v248 = vadd.f32 0.0, %v247
    %v249 = vpop.f32.mrb[0].mxu0
    %v250 = vadd.f32 0.0, %v249
    %v251 = vpop.f32.mrb[0].mxu0
    %v252 = vadd.f32 0.0, %v251
    %253 = vdwg.mxu0
    %v257 = vunpack.c.l.b16 %v59
    %v258 = vunpack.c.h.b16 %v59
    %v259 = vunpack.c.l.b16 %v60
    %v260 = vunpack.c.h.b16 %v60
    %v261 = vunpack.c.l.b16 %v61
    %v262 = vunpack.c.h.b16 %v61
    %v263 = vpack.c.b16 %v259, %v257
    %v264 = vpack.c.b16 %v260, %v258
    %v265 = vpack.c.b16 %v261, %v261
    %v266 = vpack.c.b16 %v262, %v262
    %v269 = vsel %vm97, %v57, 0
    %v271 = vsel %vm97, %v58, 0
    %v274 = vsel %vm104, %v265, 0
    %v277 = vsel %vm104, %v266, 0
    %279 = vmatprep.subr.bf16.mxu0 %v264
    %280 = vmatpush1.bf16.msra.mxu0 %v263
    %281 = vmatprep.subr.bf16.mxu0 %v277
    %282 = vmatpush1.bf16.msra.mxu0 %v274
    %283 = vmatprep.subr.bf16.mxu0 0
    %284 = vmatpush1.bf16.msra.mxu0 0
    %285 = vmatprep.subr.bf16.mxu0 0
    %286 = vmatpush1.bf16.msra.mxu0 0
    %287 = vmatprep.subr.bf16.mxu0 0
    %288 = vmatpush1.bf16.msra.mxu0 0
    %289 = vmatprep.subr.bf16.mxu0 0
    %290 = vmatpush1.bf16.msra.mxu0 0
    %291 = vmatprep.subr.bf16.mxu0 0
    %292 = vmatpush1.bf16.msra.mxu0 0
    %293 = vmatprep.subr.bf16.mxu0 0
    %294 = vmatpush1.bf16.msra.mxu0 0
    %295 = vmatprep.subr.bf16.mxu0 0
    %296 = vmatpush1.bf16.msra.mxu0 0
    %297 = vmatprep.subr.bf16.mxu0 0
    %298 = vmatpush1.bf16.msra.mxu0 0
    %299 = vmatprep.subr.bf16.mxu0 0
    %300 = vmatpush1.bf16.msra.mxu0 0
    %301 = vmatprep.subr.bf16.mxu0 0
    %302 = vmatpush1.bf16.msra.mxu0 0
    %303 = vmatprep.subr.bf16.mxu0 0
    %304 = vmatpush1.bf16.msra.mxu0 0
    %305 = vmatprep.subr.bf16.mxu0 0
    %306 = vmatpush1.bf16.msra.mxu0 0
    %307 = vmatprep.subr.bf16.mxu0 0
    %308 = vmatpush1.bf16.msra.mxu0 0
    %309 = vmatprep.subr.bf16.mxu0 0
    %310 = vmatpush1.bf16.msra.mxu0 0
    %311 = vmatprep.mubr.bf16.mxu0 0
    %312 = vmatmul.mubr.bf16.gmra.mrb[0].mxu0 %v269
    %v313 = vpop.f32.mrb[0].mxu0
    %v314 = vadd.f32 %v146, %v313
    %v315 = vpop.f32.mrb[0].mxu0
    %v316 = vadd.f32 %v148, %v315
    %v317 = vpop.f32.mrb[0].mxu0
    %v318 = vadd.f32 %v150, %v317
    %v319 = vpop.f32.mrb[0].mxu0
    %v320 = vadd.f32 %v152, %v319
    %321 = vmatprep.mubr.bf16.mxu0 0
    %322 = vmatmul.mubr.bf16.gmra.mrb[0].mxu0 %v271
    %v323 = vpop.f32.mrb[0].mxu0
    %v324 = vadd.f32 %v156, %v323
    %v325 = vpop.f32.mrb[0].mxu0
    %v326 = vadd.f32 %v158, %v325
    %v327 = vpop.f32.mrb[0].mxu0
    %v328 = vadd.f32 %v160, %v327
    %v329 = vpop.f32.mrb[0].mxu0
    %v330 = vadd.f32 %v162, %v329
    %331 = vdwg.mxu0
    %v332 = vadd.f32 %v314, %v236
    %v333 = vadd.f32 %v316, %v238
    %v334 = vadd.f32 %v318, %v240
    %v335 = vadd.f32 %v320, %v242
    %v336 = vadd.f32 %v324, %v246
    %v337 = vadd.f32 %v326, %v248
    %v338 = vadd.f32 %v328, %v250
    %v339 = vadd.f32 %v330, %v252
    %v340 = vld [vmem:[%s2] sm:$0x3]
    %v342 = vlaneseq
    %v343 = vshrl.u32 %v342, 7
    %v344 = vsub.s32 0, %v343
    %v345 = vrot.slane %v340, %v344
    %v346 = vlaneseq
    %v347 = vshrl.u32 %v346, 7
    %v348 = vsub.s32 1, %v347
    %v349 = vrot.slane %v340, %v348
    %v352 = vadd.f32 %v332, %v345
    %v353 = vadd.f32 %v333, %v349
    %v354 = vadd.f32 %v334, %v345
    %v355 = vadd.f32 %v335, %v349
    %v356 = vadd.f32 %v336, %v345
    %v357 = vadd.f32 %v337, %v349
    %v358 = vadd.f32 %v338, %v345
    %v359 = vadd.f32 %v339, %v349
    %v360 = vmax.f32 %v352, 0.0
    %v361 = vmax.f32 %v353, 0.0
    %v362 = vmax.f32 %v354, 0.0
    %v363 = vmax.f32 %v355, 0.0
    %v364 = vmax.f32 %v356, 0.0
    %v365 = vmax.f32 %v357, 0.0
    %v366 = vmax.f32 %v358, 0.0
    %v367 = vmax.f32 %v359, 0.0
    %v368 = vpack.c.bf16 %v362, %v360
    %v369 = vpack.c.bf16 %v363, %v361
    %v370 = vpack.c.bf16 %v364, %v364
    %v371 = vpack.c.bf16 %v365, %v365
    %v372 = vld [vmem:[%s3] sm:$0xff]
    %v373 = vld [vmem:[%s3 + $0x8] sm:$0xff]
    %v374 = vld [vmem:[%s3 + $0x10] sm:$0xff]
    %v375 = vld [vmem:[%s3 + $0x18] sm:$0xff]
    %v376 = vld [vmem:[%s3 + $0x20] sm:$0xff]
    %v377 = vld [vmem:[%s3 + $0x28] sm:$0xff]
    %v378 = vld [vmem:[%s3 + $0x30] sm:$0xff]
    %v379 = vld [vmem:[%s3 + $0x38] sm:$0xff]
    %v380 = vld [vmem:[%s3 + $0x40] sm:$0xff]
    %v381 = vld [vmem:[%s3 + $0x48] sm:$0xff]
    %v382 = vld [vmem:[%s3 + $0x50] sm:$0xff]
    %v383 = vld [vmem:[%s3 + $0x58] sm:$0xff]
    %v384 = vld [vmem:[%s3 + $0x60] sm:$0xff]
    %v385 = vld [vmem:[%s3 + $0x68] sm:$0xff]
    %v386 = vld [vmem:[%s3 + $0x70] sm:$0xff]
    %v387 = vld [vmem:[%s3 + $0x78] sm:$0xff]
    %v388 = vld [vmem:[%s3 + $0x80] sm:$0xff]
    %v389 = vld [vmem:[%s3 + $0x88] sm:$0xff]
    %v390 = vld [vmem:[%s3 + $0x90] sm:$0xff]
    %v391 = vld [vmem:[%s3 + $0x98] sm:$0xff]
    %v392 = vpack.c.bf16 %v366, %v364
    %v393 = vpack.c.bf16 %v367, %v365
    %s394 = scalar_lea.vmem %s3, 160
    %v395 = vld [vmem:[%s394] sm:$0xff]
    %v396 = vld [vmem:[%s394 + $0x8] sm:$0xff]
    %v397 = vld [vmem:[%s394 + $0x10] sm:$0xff]
    %v398 = vld [vmem:[%s394 + $0x18] sm:$0xff]
    %v399 = vld [vmem:[%s394 + $0x20] sm:$0xff]
    %v400 = vld [vmem:[%s394 + $0x28] sm:$0xff]
    %v401 = vld [vmem:[%s394 + $0x30] sm:$0xff]
    %v402 = vld [vmem:[%s394 + $0x38] sm:$0xff]
    %v403 = vld [vmem:[%s394 + $0x40] sm:$0xff]
    %v404 = vld [vmem:[%s394 + $0x48] sm:$0xff]
    %v405 = vld [vmem:[%s394 + $0x50] sm:$0xff]
    %v406 = vld [vmem:[%s394 + $0x58] sm:$0xff]
    %v407 = vld [vmem:[%s394 + $0x60] sm:$0xff]
    %v408 = vld [vmem:[%s394 + $0x68] sm:$0xff]
    %v409 = vld [vmem:[%s394 + $0x70] sm:$0xff]
    %v410 = vld [vmem:[%s394 + $0x78] sm:$0xff]
    %v411 = vld [vmem:[%s394 + $0x80] sm:$0xff]
    %v412 = vld [vmem:[%s394 + $0x88] sm:$0xff]
    %v413 = vld [vmem:[%s394 + $0x90] sm:$0xff]
    %v414 = vld [vmem:[%s394 + $0x98] sm:$0xff]
    %v416 = vshrl.u32 %v368, 16
    %v418 = vshll.u32 %v368, 16
    %v420 = vrot.slane %v418, 1
    %v421 = vor.u32 %v416, %v420
    %v423 = vshll.u32 %v392, 16
    %v425 = vrot.slane %v423, 1
    %v426 = vsel %vm66, %v421, %v425
    %v428 = vshrl.u32 %v369, 16
    %v430 = vshll.u32 %v369, 16
    %v432 = vrot.slane %v430, 1
    %v433 = vor.u32 %v428, %v432
    %v435 = vshll.u32 %v393, 16
    %v437 = vrot.slane %v435, 1
    %v438 = vsel %vm66, %v433, %v437
    %v439 = vshrl.u32 %v392, 16
    %v441 = vor.u32 %v439, %v425
    %v442 = vshrl.u32 %v393, 16
    %v444 = vor.u32 %v442, %v437
    %v467 = vunpack.c.l.b16 %v395
    %v468 = vunpack.c.h.b16 %v395
    %v469 = vunpack.c.l.b16 %v396
    %v470 = vunpack.c.h.b16 %v396
    %v471 = vunpack.c.l.b16 %v397
    %v472 = vunpack.c.h.b16 %v397
    %v473 = vunpack.c.l.b16 %v398
    %v474 = vunpack.c.h.b16 %v398
    %v475 = vunpack.c.l.b16 %v399
    %v476 = vunpack.c.h.b16 %v399
    %v477 = vunpack.c.l.b16 %v400
    %v478 = vunpack.c.h.b16 %v400
    %v479 = vunpack.c.l.b16 %v401
    %v480 = vunpack.c.h.b16 %v401
    %v481 = vunpack.c.l.b16 %v402
    %v482 = vunpack.c.h.b16 %v402
    %v483 = vunpack.c.l.b16 %v403
    %v484 = vunpack.c.h.b16 %v403
    %v485 = vunpack.c.l.b16 %v404
    %v486 = vunpack.c.h.b16 %v404
    %v487 = vunpack.c.l.b16 %v405
    %v488 = vunpack.c.h.b16 %v405
    %v489 = vunpack.c.l.b16 %v406
    %v490 = vunpack.c.h.b16 %v406
    %v491 = vunpack.c.l.b16 %v407
    %v492 = vunpack.c.h.b16 %v407
    %v493 = vunpack.c.l.b16 %v408
    %v494 = vunpack.c.h.b16 %v408
    %v495 = vunpack.c.l.b16 %v409
    %v496 = vunpack.c.h.b16 %v409
    %v497 = vunpack.c.l.b16 %v410
    %v498 = vunpack.c.h.b16 %v410
    %v499 = vunpack.c.l.b16 %v411
    %v500 = vunpack.c.h.b16 %v411
    %v501 = vunpack.c.l.b16 %v412
    %v502 = vunpack.c.h.b16 %v412
    %v503 = vunpack.c.l.b16 %v413
    %v504 = vunpack.c.h.b16 %v413
    %v505 = vunpack.c.l.b16 %v414
    %v506 = vunpack.c.h.b16 %v414
    %v507 = vpack.c.b16 %v469, %v467
    %v508 = vpack.c.b16 %v470, %v468
    %v509 = vpack.c.b16 %v473, %v471
    %v510 = vpack.c.b16 %v474, %v472
    %v511 = vpack.c.b16 %v477, %v475
    %v512 = vpack.c.b16 %v478, %v476
    %v513 = vpack.c.b16 %v481, %v479
    %v514 = vpack.c.b16 %v482, %v480
    %v515 = vpack.c.b16 %v485, %v483
    %v516 = vpack.c.b16 %v486, %v484
    %v517 = vpack.c.b16 %v489, %v487
    %v518 = vpack.c.b16 %v490, %v488
    %v519 = vpack.c.b16 %v493, %v491
    %v520 = vpack.c.b16 %v494, %v492
    %v521 = vpack.c.b16 %v497, %v495
    %v522 = vpack.c.b16 %v498, %v496
    %v523 = vpack.c.b16 %v501, %v499
    %v524 = vpack.c.b16 %v502, %v500
    %v525 = vpack.c.b16 %v505, %v503
    %v526 = vpack.c.b16 %v506, %v504
    %vm547 = vcmask 261120
    %v549 = vsel %vm547, %v438, 0
    %v552 = vsel %vm547, %v444, 0
    %554 = vmatprep.subr.bf16.mxu0 %v508
    %555 = vmatpush1.bf16.msra.mxu0 %v507
    %556 = vmatprep.subr.bf16.mxu0 %v510
    %557 = vmatpush1.bf16.msra.mxu0 %v509
    %558 = vmatprep.subr.bf16.mxu0 %v512
    %559 = vmatpush1.bf16.msra.mxu0 %v511
    %560 = vmatprep.subr.bf16.mxu0 %v514
    %561 = vmatpush1.bf16.msra.mxu0 %v513
    %562 = vmatprep.subr.bf16.mxu0 %v516
    %563 = vmatpush1.bf16.msra.mxu0 %v515
    %564 = vmatprep.subr.bf16.mxu0 %v518
    %565 = vmatpush1.bf16.msra.mxu0 %v517
    %566 = vmatprep.subr.bf16.mxu0 %v520
    %567 = vmatpush1.bf16.msra.mxu0 %v519
    %568 = vmatprep.subr.bf16.mxu0 %v522
    %569 = vmatpush1.bf16.msra.mxu0 %v521
    %570 = vmatprep.subr.bf16.mxu0 %v524
    %571 = vmatpush1.bf16.msra.mxu0 %v523
    %572 = vmatprep.subr.bf16.mxu0 %v526
    %573 = vmatpush1.bf16.msra.mxu0 %v525
    %574 = vmatprep.subr.bf16.mxu0 0
    %575 = vmatpush1.bf16.msra.mxu0 0
    %576 = vmatprep.subr.bf16.mxu0 0
    %577 = vmatpush1.bf16.msra.mxu0 0
    %578 = vmatprep.subr.bf16.mxu0 0
    %579 = vmatpush1.bf16.msra.mxu0 0
    %580 = vmatprep.subr.bf16.mxu0 0
    %581 = vmatpush1.bf16.msra.mxu0 0
    %582 = vmatprep.subr.bf16.mxu0 0
    %583 = vmatpush1.bf16.msra.mxu0 0
    %584 = vmatprep.subr.bf16.mxu0 0
    %585 = vmatpush1.bf16.msra.mxu0 0
    %586 = vmatprep.mubr.bf16.mxu0 %v549
    %587 = vmatmul.mubr.bf16.gmra.mrb[0].mxu0 %v426
    %v588 = vpop.f32.mrb[0].mxu0
    %v589 = vadd.f32 0.0, %v588
    %v590 = vpop.f32.mrb[0].mxu0
    %v591 = vadd.f32 0.0, %v590
    %v592 = vpop.f32.mrb[0].mxu0
    %v593 = vadd.f32 0.0, %v592
    %v594 = vpop.f32.mrb[0].mxu0
    %v595 = vadd.f32 0.0, %v594
    %596 = vmatprep.mubr.bf16.mxu0 %v552
    %597 = vmatmul.mubr.bf16.gmra.mrb[0].mxu0 %v441
    %v598 = vpop.f32.mrb[0].mxu0
    %v599 = vadd.f32 0.0, %v598
    %v600 = vpop.f32.mrb[0].mxu0
    %v601 = vadd.f32 0.0, %v600
    %v602 = vpop.f32.mrb[0].mxu0
    %v603 = vpop.f32.mrb[0].mxu0
    %604 = vdwg.mxu0
    %s605 = scalar_lea.vmem %s3, 320
    %v606 = vld [vmem:[%s605] sm:$0xff]
    %v607 = vld [vmem:[%s605 + $0x8] sm:$0xff]
    %v608 = vld [vmem:[%s605 + $0x10] sm:$0xff]
    %v609 = vld [vmem:[%s605 + $0x18] sm:$0xff]
    %v610 = vld [vmem:[%s605 + $0x20] sm:$0xff]
    %v611 = vld [vmem:[%s605 + $0x28] sm:$0xff]
    %v612 = vld [vmem:[%s605 + $0x30] sm:$0xff]
    %v613 = vld [vmem:[%s605 + $0x38] sm:$0xff]
    %v614 = vld [vmem:[%s605 + $0x40] sm:$0xff]
    %v615 = vld [vmem:[%s605 + $0x48] sm:$0xff]
    %v616 = vld [vmem:[%s605 + $0x50] sm:$0xff]
    %v617 = vld [vmem:[%s605 + $0x58] sm:$0xff]
    %v618 = vld [vmem:[%s605 + $0x60] sm:$0xff]
    %v619 = vld [vmem:[%s605 + $0x68] sm:$0xff]
    %v620 = vld [vmem:[%s605 + $0x70] sm:$0xff]
    %v621 = vld [vmem:[%s605 + $0x78] sm:$0xff]
    %v622 = vld [vmem:[%s605 + $0x80] sm:$0xff]
    %v623 = vld [vmem:[%s605 + $0x88] sm:$0xff]
    %v624 = vld [vmem:[%s605 + $0x90] sm:$0xff]
    %v625 = vld [vmem:[%s605 + $0x98] sm:$0xff]
    %v630 = vrot.slane %v368, 1
    %v631 = vrot.slane %v392, 1
    %v632 = vsel %vm170, %v630, %v631
    %v633 = vrot.slane %v369, 1
    %v634 = vrot.slane %v393, 1
    %v635 = vsel %vm170, %v633, %v634
    %v658 = vunpack.c.l.b16 %v606
    %v659 = vunpack.c.h.b16 %v606
    %v660 = vunpack.c.l.b16 %v607
    %v661 = vunpack.c.h.b16 %v607
    %v662 = vunpack.c.l.b16 %v608
    %v663 = vunpack.c.h.b16 %v608
    %v664 = vunpack.c.l.b16 %v609
    %v665 = vunpack.c.h.b16 %v609
    %v666 = vunpack.c.l.b16 %v610
    %v667 = vunpack.c.h.b16 %v610
    %v668 = vunpack.c.l.b16 %v611
    %v669 = vunpack.c.h.b16 %v611
    %v670 = vunpack.c.l.b16 %v612
    %v671 = vunpack.c.h.b16 %v612
    %v672 = vunpack.c.l.b16 %v613
    %v673 = vunpack.c.h.b16 %v613
    %v674 = vunpack.c.l.b16 %v614
    %v675 = vunpack.c.h.b16 %v614
    %v676 = vunpack.c.l.b16 %v615
    %v677 = vunpack.c.h.b16 %v615
    %v678 = vunpack.c.l.b16 %v616
    %v679 = vunpack.c.h.b16 %v616
    %v680 = vunpack.c.l.b16 %v617
    %v681 = vunpack.c.h.b16 %v617
    %v682 = vunpack.c.l.b16 %v618
    %v683 = vunpack.c.h.b16 %v618
    %v684 = vunpack.c.l.b16 %v619
    %v685 = vunpack.c.h.b16 %v619
    %v686 = vunpack.c.l.b16 %v620
    %v687 = vunpack.c.h.b16 %v620
    %v688 = vunpack.c.l.b16 %v621
    %v689 = vunpack.c.h.b16 %v621
    %v690 = vunpack.c.l.b16 %v622
    %v691 = vunpack.c.h.b16 %v622
    %v692 = vunpack.c.l.b16 %v623
    %v693 = vunpack.c.h.b16 %v623
    %v694 = vunpack.c.l.b16 %v624
    %v695 = vunpack.c.h.b16 %v624
    %v696 = vunpack.c.l.b16 %v625
    %v697 = vunpack.c.h.b16 %v625
    %v698 = vpack.c.b16 %v660, %v658
    %v699 = vpack.c.b16 %v661, %v659
    %v700 = vpack.c.b16 %v664, %v662
    %v701 = vpack.c.b16 %v665, %v663
    %v702 = vpack.c.b16 %v668, %v666
    %v703 = vpack.c.b16 %v669, %v667
    %v704 = vpack.c.b16 %v672, %v670
    %v705 = vpack.c.b16 %v673, %v671
    %v706 = vpack.c.b16 %v676, %v674
    %v707 = vpack.c.b16 %v677, %v675
    %v708 = vpack.c.b16 %v680, %v678
    %v709 = vpack.c.b16 %v681, %v679
    %v710 = vpack.c.b16 %v684, %v682
    %v711 = vpack.c.b16 %v685, %v683
    %v712 = vpack.c.b16 %v688, %v686
    %v713 = vpack.c.b16 %v689, %v687
    %v714 = vpack.c.b16 %v692, %v690
    %v715 = vpack.c.b16 %v693, %v691
    %v716 = vpack.c.b16 %v696, %v694
    %v717 = vpack.c.b16 %v697, %v695
    %v739 = vsel %vm547, %v635, 0
    %v742 = vsel %vm547, %v634, 0
    %744 = vmatprep.subr.bf16.mxu0 %v699
    %745 = vmatpush1.bf16.msra.mxu0 %v698
    %746 = vmatprep.subr.bf16.mxu0 %v701
    %747 = vmatpush1.bf16.msra.mxu0 %v700
    %748 = vmatprep.subr.bf16.mxu0 %v703
    %749 = vmatpush1.bf16.msra.mxu0 %v702
    %750 = vmatprep.subr.bf16.mxu0 %v705
    %751 = vmatpush1.bf16.msra.mxu0 %v704
    %752 = vmatprep.subr.bf16.mxu0 %v707
    %753 = vmatpush1.bf16.msra.mxu0 %v706
    %754 = vmatprep.subr.bf16.mxu0 %v709
    %755 = vmatpush1.bf16.msra.mxu0 %v708
    %756 = vmatprep.subr.bf16.mxu0 %v711
    %757 = vmatpush1.bf16.msra.mxu0 %v710
    %758 = vmatprep.subr.bf16.mxu0 %v713
    %759 = vmatpush1.bf16.msra.mxu0 %v712
    %760 = vmatprep.subr.bf16.mxu0 %v715
    %761 = vmatpush1.bf16.msra.mxu0 %v714
    %762 = vmatprep.subr.bf16.mxu0 %v717
    %763 = vmatpush1.bf16.msra.mxu0 %v716
    %764 = vmatprep.subr.bf16.mxu0 0
    %765 = vmatpush1.bf16.msra.mxu0 0
    %766 = vmatprep.subr.bf16.mxu0 0
    %767 = vmatpush1.bf16.msra.mxu0 0
    %768 = vmatprep.subr.bf16.mxu0 0
    %769 = vmatpush1.bf16.msra.mxu0 0
    %770 = vmatprep.subr.bf16.mxu0 0
    %771 = vmatpush1.bf16.msra.mxu0 0
    %772 = vmatprep.subr.bf16.mxu0 0
    %773 = vmatpush1.bf16.msra.mxu0 0
    %774 = vmatprep.subr.bf16.mxu0 0
    %775 = vmatpush1.bf16.msra.mxu0 0
    %776 = vmatprep.mubr.bf16.mxu0 %v739
    %777 = vmatmul.mubr.bf16.gmra.mrb[0].mxu0 %v632
    %v778 = vpop.f32.mrb[0].mxu0
    %v779 = vadd.f32 0.0, %v778
    %v780 = vpop.f32.mrb[0].mxu0
    %v781 = vadd.f32 0.0, %v780
    %v782 = vpop.f32.mrb[0].mxu0
    %v783 = vadd.f32 0.0, %v782
    %v784 = vpop.f32.mrb[0].mxu0
    %v785 = vadd.f32 0.0, %v784
    %786 = vmatprep.mubr.bf16.mxu0 %v742
    %787 = vmatmul.mubr.bf16.gmra.mrb[0].mxu0 %v631
    %v788 = vpop.f32.mrb[0].mxu0
    %v789 = vadd.f32 0.0, %v788
    %v790 = vpop.f32.mrb[0].mxu0
    %v791 = vadd.f32 0.0, %v790
    %v792 = vpop.f32.mrb[0].mxu0
    %v793 = vpop.f32.mrb[0].mxu0
    %794 = vdwg.mxu0
    %v815 = vunpack.c.l.b16 %v372
    %v816 = vunpack.c.h.b16 %v372
    %v817 = vunpack.c.l.b16 %v373
    %v818 = vunpack.c.h.b16 %v373
    %v819 = vunpack.c.l.b16 %v374
    %v820 = vunpack.c.h.b16 %v374
    %v821 = vunpack.c.l.b16 %v375
    %v822 = vunpack.c.h.b16 %v375
    %v823 = vunpack.c.l.b16 %v376
    %v824 = vunpack.c.h.b16 %v376
    %v825 = vunpack.c.l.b16 %v377
    %v826 = vunpack.c.h.b16 %v377
    %v827 = vunpack.c.l.b16 %v378
    %v828 = vunpack.c.h.b16 %v378
    %v829 = vunpack.c.l.b16 %v379
    %v830 = vunpack.c.h.b16 %v379
    %v831 = vunpack.c.l.b16 %v380
    %v832 = vunpack.c.h.b16 %v380
    %v833 = vunpack.c.l.b16 %v381
    %v834 = vunpack.c.h.b16 %v381
    %v835 = vunpack.c.l.b16 %v382
    %v836 = vunpack.c.h.b16 %v382
    %v837 = vunpack.c.l.b16 %v383
    %v838 = vunpack.c.h.b16 %v383
    %v839 = vunpack.c.l.b16 %v384
    %v840 = vunpack.c.h.b16 %v384
    %v841 = vunpack.c.l.b16 %v385
    %v842 = vunpack.c.h.b16 %v385
    %v843 = vunpack.c.l.b16 %v386
    %v844 = vunpack.c.h.b16 %v386
    %v845 = vunpack.c.l.b16 %v387
    %v846 = vunpack.c.h.b16 %v387
    %v847 = vunpack.c.l.b16 %v388
    %v848 = vunpack.c.h.b16 %v388
    %v849 = vunpack.c.l.b16 %v389
    %v850 = vunpack.c.h.b16 %v389
    %v851 = vunpack.c.l.b16 %v390
    %v852 = vunpack.c.h.b16 %v390
    %v853 = vunpack.c.l.b16 %v391
    %v854 = vunpack.c.h.b16 %v391
    %v855 = vpack.c.b16 %v817, %v815
    %v856 = vpack.c.b16 %v818, %v816
    %v857 = vpack.c.b16 %v821, %v819
    %v858 = vpack.c.b16 %v822, %v820
    %v859 = vpack.c.b16 %v825, %v823
    %v860 = vpack.c.b16 %v826, %v824
    %v861 = vpack.c.b16 %v829, %v827
    %v862 = vpack.c.b16 %v830, %v828
    %v863 = vpack.c.b16 %v833, %v831
    %v864 = vpack.c.b16 %v834, %v832
    %v865 = vpack.c.b16 %v837, %v835
    %v866 = vpack.c.b16 %v838, %v836
    %v867 = vpack.c.b16 %v841, %v839
    %v868 = vpack.c.b16 %v842, %v840
    %v869 = vpack.c.b16 %v845, %v843
    %v870 = vpack.c.b16 %v846, %v844
    %v871 = vpack.c.b16 %v849, %v847
    %v872 = vpack.c.b16 %v850, %v848
    %v873 = vpack.c.b16 %v853, %v851
    %v874 = vpack.c.b16 %v854, %v852
    %v895 = vsel %vm547, %v369, 0
    %v898 = vsel %vm547, %v371, 0
    %900 = vmatprep.subr.bf16.mxu0 %v856
    %901 = vmatpush1.bf16.msra.mxu0 %v855
    %902 = vmatprep.subr.bf16.mxu0 %v858
    %903 = vmatpush1.bf16.msra.mxu0 %v857
    %904 = vmatprep.subr.bf16.mxu0 %v860
    %905 = vmatpush1.bf16.msra.mxu0 %v859
    %906 = vmatprep.subr.bf16.mxu0 %v862
    %907 = vmatpush1.bf16.msra.mxu0 %v861
    %908 = vmatprep.subr.bf16.mxu0 %v864
    %909 = vmatpush1.bf16.msra.mxu0 %v863
    %910 = vmatprep.subr.bf16.mxu0 %v866
    %911 = vmatpush1.bf16.msra.mxu0 %v865
    %912 = vmatprep.subr.bf16.mxu0 %v868
    %913 = vmatpush1.bf16.msra.mxu0 %v867
    %914 = vmatprep.subr.bf16.mxu0 %v870
    %915 = vmatpush1.bf16.msra.mxu0 %v869
    %916 = vmatprep.subr.bf16.mxu0 %v872
    %917 = vmatpush1.bf16.msra.mxu0 %v871
    %918 = vmatprep.subr.bf16.mxu0 %v874
    %919 = vmatpush1.bf16.msra.mxu0 %v873
    %920 = vmatprep.subr.bf16.mxu0 0
    %921 = vmatpush1.bf16.msra.mxu0 0
    %922 = vmatprep.subr.bf16.mxu0 0
    %923 = vmatpush1.bf16.msra.mxu0 0
    %924 = vmatprep.subr.bf16.mxu0 0
    %925 = vmatpush1.bf16.msra.mxu0 0
    %926 = vmatprep.subr.bf16.mxu0 0
    %927 = vmatpush1.bf16.msra.mxu0 0
    %928 = vmatprep.subr.bf16.mxu0 0
    %929 = vmatpush1.bf16.msra.mxu0 0
    %930 = vmatprep.subr.bf16.mxu0 0
    %931 = vmatpush1.bf16.msra.mxu0 0
    %932 = vmatprep.mubr.bf16.mxu0 %v895
    %933 = vmatmul.mubr.bf16.gmra.mrb[0].mxu0 %v368
    %v934 = vpop.f32.mrb[0].mxu0
    %v935 = vadd.f32 %v589, %v934
    %v936 = vpop.f32.mrb[0].mxu0
    %v937 = vadd.f32 %v591, %v936
    %v938 = vpop.f32.mrb[0].mxu0
    %v939 = vadd.f32 %v593, %v938
    %v940 = vpop.f32.mrb[0].mxu0
    %v941 = vadd.f32 %v595, %v940
    %942 = vmatprep.mubr.bf16.mxu0 %v898
    %943 = vmatmul.mubr.bf16.gmra.mrb[0].mxu0 %v370
    %v944 = vpop.f32.mrb[0].mxu0
    %v945 = vadd.f32 %v599, %v944
    %v946 = vpop.f32.mrb[0].mxu0
    %v947 = vadd.f32 %v601, %v946
    %v948 = vpop.f32.mrb[0].mxu0
    %v949 = vpop.f32.mrb[0].mxu0
    %950 = vdwg.mxu0
    %v951 = vadd.f32 %v935, %v779
    %v952 = vadd.f32 %v937, %v781
    %v953 = vadd.f32 %v939, %v783
    %v954 = vadd.f32 %v941, %v785
    %v955 = vadd.f32 %v945, %v789
    %v956 = vadd.f32 %v947, %v791
    %v957 = vld [vmem:[%s4] sm:$0x3]
    %v959 = vlaneseq
    %v960 = vshrl.u32 %v959, 7
    %v961 = vsub.s32 0, %v960
    %v962 = vrot.slane %v957, %v961
    %v963 = vlaneseq
    %v964 = vshrl.u32 %v963, 7
    %v965 = vsub.s32 1, %v964
    %v966 = vrot.slane %v957, %v965
    %v969 = vadd.f32 %v951, %v962
    %v970 = vadd.f32 %v952, %v966
    %v971 = vadd.f32 %v953, %v962
    %v972 = vadd.f32 %v954, %v966
    %v973 = vadd.f32 %v955, %v962
    %v974 = vadd.f32 %v956, %v966
    %v975 = vmax.f32 %v969, 0.0
    %v976 = vmax.f32 %v970, 0.0
    %v977 = vmax.f32 %v971, 0.0
    %v978 = vmax.f32 %v972, 0.0
    %v979 = vmax.f32 %v973, 0.0
    %v980 = vmax.f32 %v974, 0.0
    %vm987 = vcmask 1046528
    %v988 = vrot.slane %v975, 1
    %v989 = vrot.slane %v977, 1
    %v990 = vsel %vm987, %v988, %v989
    %v991 = vrot.slane %v976, 1
    %v992 = vrot.slane %v978, 1
    %v993 = vsel %vm987, %v991, %v992
    %v994 = vrot.slane %v979, 1
    %v995 = vsel %vm987, %v989, %v994
    %v996 = vrot.slane %v980, 1
    %v997 = vsel %vm987, %v992, %v996
    %vm1004 = vcmask 1045504
    %v1005 = vrot.slane %v975, 2
    %v1006 = vrot.slane %v977, 2
    %v1007 = vsel %vm1004, %v1005, %v1006
    %v1008 = vrot.slane %v976, 2
    %v1009 = vrot.slane %v978, 2
    %v1010 = vsel %vm1004, %v1008, %v1009
    %v1011 = vrot.slane %v979, 2
    %v1012 = vsel %vm1004, %v1006, %v1011
    %v1013 = vrot.slane %v980, 2
    %v1014 = vsel %vm1004, %v1009, %v1013
    %vm1021 = vcmask 1044480
    %v1022 = vrot.slane %v975, 3
    %v1023 = vrot.slane %v977, 3
    %v1024 = vsel %vm1021, %v1022, %v1023
    %v1025 = vrot.slane %v976, 3
    %v1026 = vrot.slane %v978, 3
    %v1027 = vsel %vm1021, %v1025, %v1026
    %v1028 = vrot.slane %v979, 3
    %v1029 = vsel %vm1021, %v1023, %v1028
    %v1030 = vrot.slane %v980, 3
    %v1031 = vsel %vm1021, %v1026, %v1030
    %v1038 = vrot.slane %v975, 4
    %v1039 = vrot.slane %v977, 4
    %v1040 = vsel %vm104, %v1038, %v1039
    %v1041 = vrot.slane %v976, 4
    %v1042 = vrot.slane %v978, 4
    %v1043 = vsel %vm104, %v1041, %v1042
    %v1044 = vrot.slane %v979, 4
    %v1045 = vsel %vm104, %v1039, %v1044
    %v1046 = vrot.slane %v980, 4
    %v1047 = vsel %vm104, %v1042, %v1046
    %v1054 = vpack.c.bf16 %v977, %v975
    %v1055 = vpack.c.bf16 %v978, %v976
    %v1056 = vpack.c.bf16 %v995, %v990
    %v1057 = vpack.c.bf16 %v997, %v993
    %v1058 = vpack.c.bf16 %v1012, %v1007
    %v1059 = vpack.c.bf16 %v1014, %v1010
    %v1060 = vpack.c.bf16 %v1029, %v1024
    %v1061 = vpack.c.bf16 %v1031, %v1027
    %v1062 = vpack.c.bf16 %v1045, %v1040
    %v1063 = vpack.c.bf16 %v1047, %v1043
    %v1064 = vpack.c.bf16 %v979, %v979
    %v1065 = vpack.c.bf16 %v980, %v980
    %v1066 = vpack.c.bf16 %v994, %v994
    %v1067 = vpack.c.bf16 %v996, %v996
    %v1068 = vpack.c.bf16 %v1011, %v1011
    %v1069 = vpack.c.bf16 %v1013, %v1013
    %v1070 = vpack.c.bf16 %v1028, %v1028
    %v1071 = vpack.c.bf16 %v1030, %v1030
    %v1072 = vpack.c.bf16 %v1044, %v1044
    %v1073 = vpack.c.bf16 %v1046, %v1046
    %v1074 = vld [vmem:[#allocation2] sm:$0xff]
    %v1075 = vld [vmem:[#allocation2 + $0x8] sm:$0xff]
    %v1076 = vld [vmem:[#allocation2 + $0x10] sm:$0xff]
    %v1077 = vld [vmem:[#allocation2 + $0x18] sm:$0xff]
    %v1078 = vld [vmem:[#allocation2 + $0x20] sm:$0xff]
    %v1079 = vld [vmem:[#allocation2 + $0x28] sm:$0xff]
    %v1080 = vld [vmem:[#allocation2 + $0x30] sm:$0xff]
    %v1081 = vld [vmem:[#allocation2 + $0x38] sm:$0xff]
    %v1082 = vld [vmem:[#allocation2 + $0x40] sm:$0xff]
    %v1083 = vld [vmem:[#allocation2 + $0x48] sm:$0xff]
    %v1084 = vld [vmem:[#allocation2 + $0x50] sm:$0xff]
    %v1085 = vld [vmem:[#allocation2 + $0x58] sm:$0xff]
    %v1086 = vld [vmem:[#allocation2 + $0x60] sm:$0xff]
    %v1087 = vld [vmem:[#allocation2 + $0x68] sm:$0xff]
    %v1088 = vld [vmem:[#allocation2 + $0x70] sm:$0xff]
    %v1089 = vld [vmem:[#allocation2 + $0x78] sm:$0xff]
    %v1090 = vld [vmem:[#allocation2 + $0x80] sm:$0xff]
    %v1091 = vld [vmem:[#allocation2 + $0x88] sm:$0xff]
    %v1092 = vld [vmem:[#allocation2 + $0x90] sm:$0xff]
    %v1093 = vld [vmem:[#allocation2 + $0x98] sm:$0xff]
    %v1094 = vld [vmem:[#allocation2 + $0xa0] sm:$0xff]
    %v1095 = vld [vmem:[#allocation2 + $0xa8] sm:$0xff]
    %v1096 = vld [vmem:[#allocation2 + $0xb0] sm:$0xff]
    %v1097 = vld [vmem:[#allocation2 + $0xb8] sm:$0xff]
    %v1098 = vld [vmem:[#allocation2 + $0xc0] sm:$0xff]
    %v1099 = vld [vmem:[#allocation2 + $0xc8] sm:$0xff]
    %v1100 = vld [vmem:[#allocation2 + $0xd0] sm:$0xff]
    %v1101 = vld [vmem:[#allocation2 + $0xd8] sm:$0xff]
    %v1102 = vld [vmem:[#allocation2 + $0xe0] sm:$0xff]
    %v1103 = vld [vmem:[#allocation2 + $0xe8] sm:$0xff]
    %v1104 = vld [vmem:[#allocation2 + $0xf0] sm:$0xff]
    %v1105 = vld [vmem:[#allocation2 + $0xf8] sm:$0xff]
    %v1106 = vld [vmem:[#allocation2 + $0x100] sm:$0xff]
    %v1107 = vld [vmem:[#allocation2 + $0x108] sm:$0xff]
    %v1108 = vld [vmem:[#allocation2 + $0x110] sm:$0xff]
    %v1109 = vld [vmem:[#allocation2 + $0x118] sm:$0xff]
    %v1110 = vld [vmem:[#allocation2 + $0x120] sm:$0xff]
    %v1111 = vld [vmem:[#allocation2 + $0x128] sm:$0xff]
    %v1112 = vld [vmem:[#allocation2 + $0x130] sm:$0xff]
    %v1113 = vld [vmem:[#allocation2 + $0x138] sm:$0xff]
    %v1114 = vld [vmem:[#allocation2 + $0x140] sm:$0xff]
    %v1115 = vld [vmem:[#allocation2 + $0x148] sm:$0xff]
    %v1116 = vld [vmem:[#allocation2 + $0x150] sm:$0xff]
    %v1117 = vld [vmem:[#allocation2 + $0x158] sm:$0xff]
    %v1118 = vld [vmem:[#allocation2 + $0x160] sm:$0xff]
    %v1119 = vld [vmem:[#allocation2 + $0x168] sm:$0xff]
    %v1120 = vld [vmem:[#allocation2 + $0x170] sm:$0xff]
    %v1121 = vld [vmem:[#allocation2 + $0x178] sm:$0xff]
    %v1122 = vld [vmem:[#allocation2 + $0x180] sm:$0xff]
    %v1123 = vld [vmem:[#allocation2 + $0x188] sm:$0xff]
    %v1124 = vld [vmem:[#allocation2 + $0x190] sm:$0xff]
    %v1125 = vld [vmem:[#allocation2 + $0x198] sm:$0xff]
    %v1126 = vld [vmem:[#allocation2 + $0x1a0] sm:$0xff]
    %v1127 = vld [vmem:[#allocation2 + $0x1a8] sm:$0xff]
    %v1128 = vld [vmem:[#allocation2 + $0x1b0] sm:$0xff]
    %v1129 = vld [vmem:[#allocation2 + $0x1b8] sm:$0xff]
    %v1130 = vld [vmem:[#allocation2 + $0x1c0] sm:$0xff]
    %v1131 = vld [vmem:[#allocation2 + $0x1c8] sm:$0xff]
    %v1132 = vld [vmem:[#allocation2 + $0x1d0] sm:$0xff]
    %v1133 = vld [vmem:[#allocation2 + $0x1d8] sm:$0xff]
    %v1134 = vld [vmem:[#allocation2 + $0x1e0] sm:$0xff]
    %v1135 = vld [vmem:[#allocation2 + $0x1e8] sm:$0xff]
    %v1136 = vld [vmem:[#allocation2 + $0x1f0] sm:$0xff]
    %v1137 = vld [vmem:[#allocation2 + $0x1f8] sm:$0xff]
    %v1138 = vld [vmem:[#allocation2 + $0x200] sm:$0xff]
    %v1139 = vld [vmem:[#allocation2 + $0x208] sm:$0xff]
    %v1140 = vld [vmem:[#allocation2 + $0x210] sm:$0xff]
    %v1141 = vld [vmem:[#allocation2 + $0x218] sm:$0xff]
    %v1142 = vld [vmem:[#allocation2 + $0x220] sm:$0xff]
    %v1143 = vld [vmem:[#allocation2 + $0x228] sm:$0xff]
    %v1144 = vld [vmem:[#allocation2 + $0x230] sm:$0xff]
    %v1145 = vld [vmem:[#allocation2 + $0x238] sm:$0xff]
    %v1146 = vld [vmem:[#allocation2 + $0x240] sm:$0xff]
    %v1147 = vld [vmem:[#allocation2 + $0x248] sm:$0xff]
    %v1148 = vld [vmem:[#allocation2 + $0x250] sm:$0xff]
    %v1149 = vld [vmem:[#allocation2 + $0x258] sm:$0xff]
    %v1150 = vld [vmem:[#allocation2 + $0x260] sm:$0xff]
    %v1151 = vld [vmem:[#allocation2 + $0x268] sm:$0xff]
    %v1152 = vld [vmem:[#allocation2 + $0x270] sm:$0xff]
    %v1153 = vld [vmem:[#allocation2 + $0x278] sm:$0xff]
    %v1154 = vld [vmem:[#allocation2 + $0x280] sm:$0xff]
    %v1155 = vld [vmem:[#allocation2 + $0x288] sm:$0xff]
    %v1156 = vld [vmem:[#allocation2 + $0x290] sm:$0xff]
    %v1157 = vld [vmem:[#allocation2 + $0x298] sm:$0xff]
    %v1158 = vld [vmem:[#allocation2 + $0x2a0] sm:$0xff]
    %v1159 = vld [vmem:[#allocation2 + $0x2a8] sm:$0xff]
    %v1160 = vld [vmem:[#allocation2 + $0x2b0] sm:$0xff]
    %v1161 = vld [vmem:[#allocation2 + $0x2b8] sm:$0xff]
    %v1162 = vld [vmem:[#allocation2 + $0x2c0] sm:$0xff]
    %v1163 = vld [vmem:[#allocation2 + $0x2c8] sm:$0xff]
    %v1164 = vld [vmem:[#allocation2 + $0x2d0] sm:$0xff]
    %v1165 = vld [vmem:[#allocation2 + $0x2d8] sm:$0xff]
    %v1166 = vld [vmem:[#allocation2 + $0x2e0] sm:$0xff]
    %v1167 = vld [vmem:[#allocation2 + $0x2e8] sm:$0xff]
    %v1168 = vld [vmem:[#allocation2 + $0x2f0] sm:$0xff]
    %v1169 = vld [vmem:[#allocation2 + $0x2f8] sm:$0xff]
    %v1170 = vld [vmem:[#allocation2 + $0x300] sm:$0xff]
    %v1171 = vld [vmem:[#allocation2 + $0x308] sm:$0xff]
    %v1172 = vld [vmem:[#allocation2 + $0x310] sm:$0xff]
    %v1173 = vld [vmem:[#allocation2 + $0x318] sm:$0xff]
    %v1174 = vld [vmem:[#allocation2 + $0x320] sm:$0xff]
    %v1175 = vld [vmem:[#allocation2 + $0x328] sm:$0xff]
    %v1176 = vld [vmem:[#allocation2 + $0x330] sm:$0xff]
    %v1177 = vld [vmem:[#allocation2 + $0x338] sm:$0xff]
    %v1178 = vld [vmem:[#allocation2 + $0x340] sm:$0xff]
    %v1179 = vld [vmem:[#allocation2 + $0x348] sm:$0xff]
    %v1180 = vld [vmem:[#allocation2 + $0x350] sm:$0xff]
    %v1181 = vld [vmem:[#allocation2 + $0x358] sm:$0xff]
    %v1182 = vld [vmem:[#allocation2 + $0x360] sm:$0xff]
    %v1183 = vld [vmem:[#allocation2 + $0x368] sm:$0xff]
    %v1184 = vld [vmem:[#allocation2 + $0x370] sm:$0xff]
    %v1185 = vld [vmem:[#allocation2 + $0x378] sm:$0xff]
    %v1186 = vld [vmem:[#allocation2 + $0x380] sm:$0xff]
    %v1187 = vld [vmem:[#allocation2 + $0x388] sm:$0xff]
    %v1188 = vld [vmem:[#allocation2 + $0x390] sm:$0xff]
    %v1189 = vld [vmem:[#allocation2 + $0x398] sm:$0xff]
    %v1190 = vld [vmem:[#allocation2 + $0x3a0] sm:$0xff]
    %v1191 = vld [vmem:[#allocation2 + $0x3a8] sm:$0xff]
    %v1192 = vld [vmem:[#allocation2 + $0x3b0] sm:$0xff]
    %v1193 = vld [vmem:[#allocation2 + $0x3b8] sm:$0xff]
    %v1194 = vld [vmem:[#allocation2 + $0x3c0] sm:$0xff]
    %v1195 = vld [vmem:[#allocation2 + $0x3c8] sm:$0xff]
    %v1196 = vld [vmem:[#allocation2 + $0x3d0] sm:$0xff]
    %v1197 = vld [vmem:[#allocation2 + $0x3d8] sm:$0xff]
    %v1198 = vld [vmem:[#allocation2 + $0x3e0] sm:$0xff]
    %v1199 = vld [vmem:[#allocation2 + $0x3e8] sm:$0xff]
    %v1200 = vld [vmem:[#allocation2 + $0x3f0] sm:$0xff]
    %v1201 = vld [vmem:[#allocation2 + $0x3f8] sm:$0xff]
    %v1202 = vld [vmem:[#allocation2 + $0x400] sm:$0xff]
    %v1203 = vld [vmem:[#allocation2 + $0x408] sm:$0xff]
    %v1204 = vld [vmem:[#allocation2 + $0x410] sm:$0xff]
    %v1205 = vld [vmem:[#allocation2 + $0x418] sm:$0xff]
    %v1206 = vld [vmem:[#allocation2 + $0x420] sm:$0xff]
    %v1207 = vld [vmem:[#allocation2 + $0x428] sm:$0xff]
    %v1208 = vld [vmem:[#allocation2 + $0x430] sm:$0xff]
    %v1209 = vld [vmem:[#allocation2 + $0x438] sm:$0xff]
    %v1210 = vld [vmem:[#allocation2 + $0x440] sm:$0xff]
    %v1211 = vld [vmem:[#allocation2 + $0x448] sm:$0xff]
    %v1212 = vld [vmem:[#allocation2 + $0x450] sm:$0xff]
    %v1213 = vld [vmem:[#allocation2 + $0x458] sm:$0xff]
    %v1214 = vld [vmem:[#allocation2 + $0x460] sm:$0xff]
    %v1215 = vld [vmem:[#allocation2 + $0x468] sm:$0xff]
    %v1216 = vld [vmem:[#allocation2 + $0x470] sm:$0xff]
    %v1217 = vld [vmem:[#allocation2 + $0x478] sm:$0xff]
    %v1218 = vld [vmem:[#allocation2 + $0x480] sm:$0xff]
    %v1219 = vld [vmem:[#allocation2 + $0x488] sm:$0xff]
    %v1220 = vld [vmem:[#allocation2 + $0x490] sm:$0xff]
    %v1221 = vld [vmem:[#allocation2 + $0x498] sm:$0xff]
    %v1222 = vld [vmem:[#allocation2 + $0x4a0] sm:$0xff]
    %v1223 = vld [vmem:[#allocation2 + $0x4a8] sm:$0xff]
    %v1224 = vld [vmem:[#allocation2 + $0x4b0] sm:$0xff]
    %v1225 = vld [vmem:[#allocation2 + $0x4b8] sm:$0xff]
    %v1226 = vld [vmem:[#allocation2 + $0x4c0] sm:$0xff]
    %v1227 = vld [vmem:[#allocation2 + $0x4c8] sm:$0xff]
    %v1228 = vld [vmem:[#allocation2 + $0x4d0] sm:$0xff]
    %v1229 = vld [vmem:[#allocation2 + $0x4d8] sm:$0xff]
    %v1230 = vld [vmem:[#allocation2 + $0x4e0] sm:$0xff]
    %v1231 = vld [vmem:[#allocation2 + $0x4e8] sm:$0xff]
    %v1232 = vld [vmem:[#allocation2 + $0x4f0] sm:$0xff]
    %v1233 = vld [vmem:[#allocation2 + $0x4f8] sm:$0xff]
    %v1234 = vld [vmem:[%s6] sm:$0x3]
    %v1236 = vlaneseq
    %v1237 = vshrl.u32 %v1236, 7
    %v1238 = vsub.s32 0, %v1237
    %v1239 = vrot.slane %v1234, %v1238
    %v1240 = vlaneseq
    %v1241 = vshrl.u32 %v1240, 7
    %v1242 = vsub.s32 1, %v1241
    %v1243 = vrot.slane %v1234, %v1242
    %v1406 = vunpack.c.l.b16 %v1074
    %v1407 = vunpack.c.h.b16 %v1074
    %v1408 = vunpack.c.l.b16 %v1075
    %v1409 = vunpack.c.h.b16 %v1075
    %v1410 = vunpack.c.l.b16 %v1076
    %v1411 = vunpack.c.h.b16 %v1076
    %v1412 = vunpack.c.l.b16 %v1077
    %v1413 = vunpack.c.h.b16 %v1077
    %v1414 = vunpack.c.l.b16 %v1078
    %v1415 = vunpack.c.h.b16 %v1078
    %v1416 = vunpack.c.l.b16 %v1079
    %v1417 = vunpack.c.h.b16 %v1079
    %v1418 = vunpack.c.l.b16 %v1080
    %v1419 = vunpack.c.h.b16 %v1080
    %v1420 = vunpack.c.l.b16 %v1081
    %v1421 = vunpack.c.h.b16 %v1081
    %v1422 = vunpack.c.l.b16 %v1082
    %v1423 = vunpack.c.h.b16 %v1082
    %v1424 = vunpack.c.l.b16 %v1083
    %v1425 = vunpack.c.h.b16 %v1083
    %v1426 = vunpack.c.l.b16 %v1084
    %v1427 = vunpack.c.h.b16 %v1084
    %v1428 = vunpack.c.l.b16 %v1085
    %v1429 = vunpack.c.h.b16 %v1085
    %v1430 = vunpack.c.l.b16 %v1086
    %v1431 = vunpack.c.h.b16 %v1086
    %v1432 = vunpack.c.l.b16 %v1087
    %v1433 = vunpack.c.h.b16 %v1087
    %v1434 = vunpack.c.l.b16 %v1088
    %v1435 = vunpack.c.h.b16 %v1088
    %v1436 = vunpack.c.l.b16 %v1089
    %v1437 = vunpack.c.h.b16 %v1089
    %v1438 = vunpack.c.l.b16 %v1090
    %v1439 = vunpack.c.h.b16 %v1090
    %v1440 = vunpack.c.l.b16 %v1091
    %v1441 = vunpack.c.h.b16 %v1091
    %v1442 = vunpack.c.l.b16 %v1092
    %v1443 = vunpack.c.h.b16 %v1092
    %v1444 = vunpack.c.l.b16 %v1093
    %v1445 = vunpack.c.h.b16 %v1093
    %v1446 = vunpack.c.l.b16 %v1094
    %v1447 = vunpack.c.h.b16 %v1094
    %v1448 = vunpack.c.l.b16 %v1095
    %v1449 = vunpack.c.h.b16 %v1095
    %v1450 = vunpack.c.l.b16 %v1096
    %v1451 = vunpack.c.h.b16 %v1096
    %v1452 = vunpack.c.l.b16 %v1097
    %v1453 = vunpack.c.h.b16 %v1097
    %v1454 = vunpack.c.l.b16 %v1098
    %v1455 = vunpack.c.h.b16 %v1098
    %v1456 = vunpack.c.l.b16 %v1099
    %v1457 = vunpack.c.h.b16 %v1099
    %v1458 = vunpack.c.l.b16 %v1100
    %v1459 = vunpack.c.h.b16 %v1100
    %v1460 = vunpack.c.l.b16 %v1101
    %v1461 = vunpack.c.h.b16 %v1101
    %v1462 = vunpack.c.l.b16 %v1102
    %v1463 = vunpack.c.h.b16 %v1102
    %v1464 = vunpack.c.l.b16 %v1103
    %v1465 = vunpack.c.h.b16 %v1103
    %v1466 = vunpack.c.l.b16 %v1104
    %v1467 = vunpack.c.h.b16 %v1104
    %v1468 = vunpack.c.l.b16 %v1105
    %v1469 = vunpack.c.h.b16 %v1105
    %v1470 = vunpack.c.l.b16 %v1106
    %v1471 = vunpack.c.h.b16 %v1106
    %v1472 = vunpack.c.l.b16 %v1107
    %v1473 = vunpack.c.h.b16 %v1107
    %v1474 = vunpack.c.l.b16 %v1108
    %v1475 = vunpack.c.h.b16 %v1108
    %v1476 = vunpack.c.l.b16 %v1109
    %v1477 = vunpack.c.h.b16 %v1109
    %v1478 = vunpack.c.l.b16 %v1110
    %v1479 = vunpack.c.h.b16 %v1110
    %v1480 = vunpack.c.l.b16 %v1111
    %v1481 = vunpack.c.h.b16 %v1111
    %v1482 = vunpack.c.l.b16 %v1112
    %v1483 = vunpack.c.h.b16 %v1112
    %v1484 = vunpack.c.l.b16 %v1113
    %v1485 = vunpack.c.h.b16 %v1113
    %v1486 = vunpack.c.l.b16 %v1114
    %v1487 = vunpack.c.h.b16 %v1114
    %v1488 = vunpack.c.l.b16 %v1115
    %v1489 = vunpack.c.h.b16 %v1115
    %v1490 = vunpack.c.l.b16 %v1116
    %v1491 = vunpack.c.h.b16 %v1116
    %v1492 = vunpack.c.l.b16 %v1117
    %v1493 = vunpack.c.h.b16 %v1117
    %v1494 = vunpack.c.l.b16 %v1118
    %v1495 = vunpack.c.h.b16 %v1118
    %v1496 = vunpack.c.l.b16 %v1119
    %v1497 = vunpack.c.h.b16 %v1119
    %v1498 = vunpack.c.l.b16 %v1120
    %v1499 = vunpack.c.h.b16 %v1120
    %v1500 = vunpack.c.l.b16 %v1121
    %v1501 = vunpack.c.h.b16 %v1121
    %v1502 = vunpack.c.l.b16 %v1122
    %v1503 = vunpack.c.h.b16 %v1122
    %v1504 = vunpack.c.l.b16 %v1123
    %v1505 = vunpack.c.h.b16 %v1123
    %v1506 = vunpack.c.l.b16 %v1124
    %v1507 = vunpack.c.h.b16 %v1124
    %v1508 = vunpack.c.l.b16 %v1125
    %v1509 = vunpack.c.h.b16 %v1125
    %v1510 = vunpack.c.l.b16 %v1126
    %v1511 = vunpack.c.h.b16 %v1126
    %v1512 = vunpack.c.l.b16 %v1127
    %v1513 = vunpack.c.h.b16 %v1127
    %v1514 = vunpack.c.l.b16 %v1128
    %v1515 = vunpack.c.h.b16 %v1128
    %v1516 = vunpack.c.l.b16 %v1129
    %v1517 = vunpack.c.h.b16 %v1129
    %v1518 = vunpack.c.l.b16 %v1130
    %v1519 = vunpack.c.h.b16 %v1130
    %v1520 = vunpack.c.l.b16 %v1131
    %v1521 = vunpack.c.h.b16 %v1131
    %v1522 = vunpack.c.l.b16 %v1132
    %v1523 = vunpack.c.h.b16 %v1132
    %v1524 = vunpack.c.l.b16 %v1133
    %v1525 = vunpack.c.h.b16 %v1133
    %v1526 = vunpack.c.l.b16 %v1134
    %v1527 = vunpack.c.h.b16 %v1134
    %v1528 = vunpack.c.l.b16 %v1135
    %v1529 = vunpack.c.h.b16 %v1135
    %v1530 = vunpack.c.l.b16 %v1136
    %v1531 = vunpack.c.h.b16 %v1136
    %v1532 = vunpack.c.l.b16 %v1137
    %v1533 = vunpack.c.h.b16 %v1137
    %v1534 = vunpack.c.l.b16 %v1138
    %v1535 = vunpack.c.h.b16 %v1138
    %v1536 = vunpack.c.l.b16 %v1139
    %v1537 = vunpack.c.h.b16 %v1139
    %v1538 = vunpack.c.l.b16 %v1140
    %v1539 = vunpack.c.h.b16 %v1140
    %v1540 = vunpack.c.l.b16 %v1141
    %v1541 = vunpack.c.h.b16 %v1141
    %v1542 = vunpack.c.l.b16 %v1142
    %v1543 = vunpack.c.h.b16 %v1142
    %v1544 = vunpack.c.l.b16 %v1143
    %v1545 = vunpack.c.h.b16 %v1143
    %v1546 = vunpack.c.l.b16 %v1144
    %v1547 = vunpack.c.h.b16 %v1144
    %v1548 = vunpack.c.l.b16 %v1145
    %v1549 = vunpack.c.h.b16 %v1145
    %v1550 = vunpack.c.l.b16 %v1146
    %v1551 = vunpack.c.h.b16 %v1146
    %v1552 = vunpack.c.l.b16 %v1147
    %v1553 = vunpack.c.h.b16 %v1147
    %v1554 = vunpack.c.l.b16 %v1148
    %v1555 = vunpack.c.h.b16 %v1148
    %v1556 = vunpack.c.l.b16 %v1149
    %v1557 = vunpack.c.h.b16 %v1149
    %v1558 = vunpack.c.l.b16 %v1150
    %v1559 = vunpack.c.h.b16 %v1150
    %v1560 = vunpack.c.l.b16 %v1151
    %v1561 = vunpack.c.h.b16 %v1151
    %v1562 = vunpack.c.l.b16 %v1152
    %v1563 = vunpack.c.h.b16 %v1152
    %v1564 = vunpack.c.l.b16 %v1153
    %v1565 = vunpack.c.h.b16 %v1153
    %v1566 = vunpack.c.l.b16 %v1154
    %v1567 = vunpack.c.h.b16 %v1154
    %v1568 = vunpack.c.l.b16 %v1155
    %v1569 = vunpack.c.h.b16 %v1155
    %v1570 = vunpack.c.l.b16 %v1156
    %v1571 = vunpack.c.h.b16 %v1156
    %v1572 = vunpack.c.l.b16 %v1157
    %v1573 = vunpack.c.h.b16 %v1157
    %v1574 = vunpack.c.l.b16 %v1158
    %v1575 = vunpack.c.h.b16 %v1158
    %v1576 = vunpack.c.l.b16 %v1159
    %v1577 = vunpack.c.h.b16 %v1159
    %v1578 = vunpack.c.l.b16 %v1160
    %v1579 = vunpack.c.h.b16 %v1160
    %v1580 = vunpack.c.l.b16 %v1161
    %v1581 = vunpack.c.h.b16 %v1161
    %v1582 = vunpack.c.l.b16 %v1162
    %v1583 = vunpack.c.h.b16 %v1162
    %v1584 = vunpack.c.l.b16 %v1163
    %v1585 = vunpack.c.h.b16 %v1163
    %v1586 = vunpack.c.l.b16 %v1164
    %v1587 = vunpack.c.h.b16 %v1164
    %v1588 = vunpack.c.l.b16 %v1165
    %v1589 = vunpack.c.h.b16 %v1165
    %v1590 = vunpack.c.l.b16 %v1166
    %v1591 = vunpack.c.h.b16 %v1166
    %v1592 = vunpack.c.l.b16 %v1167
    %v1593 = vunpack.c.h.b16 %v1167
    %v1594 = vunpack.c.l.b16 %v1168
    %v1595 = vunpack.c.h.b16 %v1168
    %v1596 = vunpack.c.l.b16 %v1169
    %v1597 = vunpack.c.h.b16 %v1169
    %v1598 = vunpack.c.l.b16 %v1170
    %v1599 = vunpack.c.h.b16 %v1170
    %v1600 = vunpack.c.l.b16 %v1171
    %v1601 = vunpack.c.h.b16 %v1171
    %v1602 = vunpack.c.l.b16 %v1172
    %v1603 = vunpack.c.h.b16 %v1172
    %v1604 = vunpack.c.l.b16 %v1173
    %v1605 = vunpack.c.h.b16 %v1173
    %v1606 = vunpack.c.l.b16 %v1174
    %v1607 = vunpack.c.h.b16 %v1174
    %v1608 = vunpack.c.l.b16 %v1175
    %v1609 = vunpack.c.h.b16 %v1175
    %v1610 = vunpack.c.l.b16 %v1176
    %v1611 = vunpack.c.h.b16 %v1176
    %v1612 = vunpack.c.l.b16 %v1177
    %v1613 = vunpack.c.h.b16 %v1177
    %v1614 = vunpack.c.l.b16 %v1178
    %v1615 = vunpack.c.h.b16 %v1178
    %v1616 = vunpack.c.l.b16 %v1179
    %v1617 = vunpack.c.h.b16 %v1179
    %v1618 = vunpack.c.l.b16 %v1180
    %v1619 = vunpack.c.h.b16 %v1180
    %v1620 = vunpack.c.l.b16 %v1181
    %v1621 = vunpack.c.h.b16 %v1181
    %v1622 = vunpack.c.l.b16 %v1182
    %v1623 = vunpack.c.h.b16 %v1182
    %v1624 = vunpack.c.l.b16 %v1183
    %v1625 = vunpack.c.h.b16 %v1183
    %v1626 = vunpack.c.l.b16 %v1184
    %v1627 = vunpack.c.h.b16 %v1184
    %v1628 = vunpack.c.l.b16 %v1185
    %v1629 = vunpack.c.h.b16 %v1185
    %v1630 = vunpack.c.l.b16 %v1186
    %v1631 = vunpack.c.h.b16 %v1186
    %v1632 = vunpack.c.l.b16 %v1187
    %v1633 = vunpack.c.h.b16 %v1187
    %v1634 = vunpack.c.l.b16 %v1188
    %v1635 = vunpack.c.h.b16 %v1188
    %v1636 = vunpack.c.l.b16 %v1189
    %v1637 = vunpack.c.h.b16 %v1189
    %v1638 = vunpack.c.l.b16 %v1190
    %v1639 = vunpack.c.h.b16 %v1190
    %v1640 = vunpack.c.l.b16 %v1191
    %v1641 = vunpack.c.h.b16 %v1191
    %v1642 = vunpack.c.l.b16 %v1192
    %v1643 = vunpack.c.h.b16 %v1192
    %v1644 = vunpack.c.l.b16 %v1193
    %v1645 = vunpack.c.h.b16 %v1193
    %v1646 = vunpack.c.l.b16 %v1194
    %v1647 = vunpack.c.h.b16 %v1194
    %v1648 = vunpack.c.l.b16 %v1195
    %v1649 = vunpack.c.h.b16 %v1195
    %v1650 = vunpack.c.l.b16 %v1196
    %v1651 = vunpack.c.h.b16 %v1196
    %v1652 = vunpack.c.l.b16 %v1197
    %v1653 = vunpack.c.h.b16 %v1197
    %v1654 = vunpack.c.l.b16 %v1198
    %v1655 = vunpack.c.h.b16 %v1198
    %v1656 = vunpack.c.l.b16 %v1199
    %v1657 = vunpack.c.h.b16 %v1199
    %v1658 = vunpack.c.l.b16 %v1200
    %v1659 = vunpack.c.h.b16 %v1200
    %v1660 = vunpack.c.l.b16 %v1201
    %v1661 = vunpack.c.h.b16 %v1201
    %v1662 = vunpack.c.l.b16 %v1202
    %v1663 = vunpack.c.h.b16 %v1202
    %v1664 = vunpack.c.l.b16 %v1203
    %v1665 = vunpack.c.h.b16 %v1203
    %v1666 = vunpack.c.l.b16 %v1204
    %v1667 = vunpack.c.h.b16 %v1204
    %v1668 = vunpack.c.l.b16 %v1205
    %v1669 = vunpack.c.h.b16 %v1205
    %v1670 = vunpack.c.l.b16 %v1206
    %v1671 = vunpack.c.h.b16 %v1206
    %v1672 = vunpack.c.l.b16 %v1207
    %v1673 = vunpack.c.h.b16 %v1207
    %v1674 = vunpack.c.l.b16 %v1208
    %v1675 = vunpack.c.h.b16 %v1208
    %v1676 = vunpack.c.l.b16 %v1209
    %v1677 = vunpack.c.h.b16 %v1209
    %v1678 = vunpack.c.l.b16 %v1210
    %v1679 = vunpack.c.h.b16 %v1210
    %v1680 = vunpack.c.l.b16 %v1211
    %v1681 = vunpack.c.h.b16 %v1211
    %v1682 = vunpack.c.l.b16 %v1212
    %v1683 = vunpack.c.h.b16 %v1212
    %v1684 = vunpack.c.l.b16 %v1213
    %v1685 = vunpack.c.h.b16 %v1213
    %v1686 = vunpack.c.l.b16 %v1214
    %v1687 = vunpack.c.h.b16 %v1214
    %v1688 = vunpack.c.l.b16 %v1215
    %v1689 = vunpack.c.h.b16 %v1215
    %v1690 = vunpack.c.l.b16 %v1216
    %v1691 = vunpack.c.h.b16 %v1216
    %v1692 = vunpack.c.l.b16 %v1217
    %v1693 = vunpack.c.h.b16 %v1217
    %v1694 = vunpack.c.l.b16 %v1218
    %v1695 = vunpack.c.h.b16 %v1218
    %v1696 = vunpack.c.l.b16 %v1219
    %v1697 = vunpack.c.h.b16 %v1219
    %v1698 = vunpack.c.l.b16 %v1220
    %v1699 = vunpack.c.h.b16 %v1220
    %v1700 = vunpack.c.l.b16 %v1221
    %v1701 = vunpack.c.h.b16 %v1221
    %v1702 = vunpack.c.l.b16 %v1222
    %v1703 = vunpack.c.h.b16 %v1222
    %v1704 = vunpack.c.l.b16 %v1223
    %v1705 = vunpack.c.h.b16 %v1223
    %v1706 = vunpack.c.l.b16 %v1224
    %v1707 = vunpack.c.h.b16 %v1224
    %v1708 = vunpack.c.l.b16 %v1225
    %v1709 = vunpack.c.h.b16 %v1225
    %v1710 = vunpack.c.l.b16 %v1226
    %v1711 = vunpack.c.h.b16 %v1226
    %v1712 = vunpack.c.l.b16 %v1227
    %v1713 = vunpack.c.h.b16 %v1227
    %v1714 = vunpack.c.l.b16 %v1228
    %v1715 = vunpack.c.h.b16 %v1228
    %v1716 = vunpack.c.l.b16 %v1229
    %v1717 = vunpack.c.h.b16 %v1229
    %v1718 = vunpack.c.l.b16 %v1230
    %v1719 = vunpack.c.h.b16 %v1230
    %v1720 = vunpack.c.l.b16 %v1231
    %v1721 = vunpack.c.h.b16 %v1231
    %v1722 = vunpack.c.l.b16 %v1232
    %v1723 = vunpack.c.h.b16 %v1232
    %v1724 = vunpack.c.l.b16 %v1233
    %v1725 = vunpack.c.h.b16 %v1233
    %v1726 = vpack.c.b16 %v1408, %v1406
    %v1727 = vpack.c.b16 %v1409, %v1407
    %v1728 = vpack.c.b16 %v1412, %v1410
    %v1729 = vpack.c.b16 %v1413, %v1411
    %v1730 = vpack.c.b16 %v1416, %v1414
    %v1731 = vpack.c.b16 %v1417, %v1415
    %v1732 = vpack.c.b16 %v1420, %v1418
    %v1733 = vpack.c.b16 %v1421, %v1419
    %v1734 = vpack.c.b16 %v1424, %v1422
    %v1735 = vpack.c.b16 %v1425, %v1423
    %v1736 = vpack.c.b16 %v1428, %v1426
    %v1737 = vpack.c.b16 %v1429, %v1427
    %v1738 = vpack.c.b16 %v1432, %v1430
    %v1739 = vpack.c.b16 %v1433, %v1431
    %v1740 = vpack.c.b16 %v1436, %v1434
    %v1741 = vpack.c.b16 %v1437, %v1435
    %v1742 = vpack.c.b16 %v1440, %v1438
    %v1743 = vpack.c.b16 %v1441, %v1439
    %v1744 = vpack.c.b16 %v1444, %v1442
    %v1745 = vpack.c.b16 %v1445, %v1443
    %v1746 = vpack.c.b16 %v1448, %v1446
    %v1747 = vpack.c.b16 %v1449, %v1447
    %v1748 = vpack.c.b16 %v1452, %v1450
    %v1749 = vpack.c.b16 %v1453, %v1451
    %v1750 = vpack.c.b16 %v1456, %v1454
    %v1751 = vpack.c.b16 %v1457, %v1455
    %v1752 = vpack.c.b16 %v1460, %v1458
    %v1753 = vpack.c.b16 %v1461, %v1459
    %v1754 = vpack.c.b16 %v1464, %v1462
    %v1755 = vpack.c.b16 %v1465, %v1463
    %v1756 = vpack.c.b16 %v1468, %v1466
    %v1757 = vpack.c.b16 %v1469, %v1467
    %v1758 = vpack.c.b16 %v1472, %v1470
    %v1759 = vpack.c.b16 %v1473, %v1471
    %v1760 = vpack.c.b16 %v1476, %v1474
    %v1761 = vpack.c.b16 %v1477, %v1475
    %v1762 = vpack.c.b16 %v1480, %v1478
    %v1763 = vpack.c.b16 %v1481, %v1479
    %v1764 = vpack.c.b16 %v1484, %v1482
    %v1765 = vpack.c.b16 %v1485, %v1483
    %v1766 = vpack.c.b16 %v1488, %v1486
    %v1767 = vpack.c.b16 %v1489, %v1487
    %v1768 = vpack.c.b16 %v1492, %v1490
    %v1769 = vpack.c.b16 %v1493, %v1491
    %v1770 = vpack.c.b16 %v1496, %v1494
    %v1771 = vpack.c.b16 %v1497, %v1495
    %v1772 = vpack.c.b16 %v1500, %v1498
    %v1773 = vpack.c.b16 %v1501, %v1499
    %v1774 = vpack.c.b16 %v1504, %v1502
    %v1775 = vpack.c.b16 %v1505, %v1503
    %v1776 = vpack.c.b16 %v1508, %v1506
    %v1777 = vpack.c.b16 %v1509, %v1507
    %v1778 = vpack.c.b16 %v1512, %v1510
    %v1779 = vpack.c.b16 %v1513, %v1511
    %v1780 = vpack.c.b16 %v1516, %v1514
    %v1781 = vpack.c.b16 %v1517, %v1515
    %v1782 = vpack.c.b16 %v1520, %v1518
    %v1783 = vpack.c.b16 %v1521, %v1519
    %v1784 = vpack.c.b16 %v1524, %v1522
    %v1785 = vpack.c.b16 %v1525, %v1523
    %v1786 = vpack.c.b16 %v1528, %v1526
    %v1787 = vpack.c.b16 %v1529, %v1527
    %v1788 = vpack.c.b16 %v1532, %v1530
    %v1789 = vpack.c.b16 %v1533, %v1531
    %v1790 = vpack.c.b16 %v1536, %v1534
    %v1791 = vpack.c.b16 %v1537, %v1535
    %v1792 = vpack.c.b16 %v1540, %v1538
    %v1793 = vpack.c.b16 %v1541, %v1539
    %v1794 = vpack.c.b16 %v1544, %v1542
    %v1795 = vpack.c.b16 %v1545, %v1543
    %v1796 = vpack.c.b16 %v1548, %v1546
    %v1797 = vpack.c.b16 %v1549, %v1547
    %v1798 = vpack.c.b16 %v1552, %v1550
    %v1799 = vpack.c.b16 %v1553, %v1551
    %v1800 = vpack.c.b16 %v1556, %v1554
    %v1801 = vpack.c.b16 %v1557, %v1555
    %v1802 = vpack.c.b16 %v1560, %v1558
    %v1803 = vpack.c.b16 %v1561, %v1559
    %v1804 = vpack.c.b16 %v1564, %v1562
    %v1805 = vpack.c.b16 %v1565, %v1563
    %v1806 = vpack.c.b16 %v1568, %v1566
    %v1807 = vpack.c.b16 %v1569, %v1567
    %v1808 = vpack.c.b16 %v1572, %v1570
    %v1809 = vpack.c.b16 %v1573, %v1571
    %v1810 = vpack.c.b16 %v1576, %v1574
    %v1811 = vpack.c.b16 %v1577, %v1575
    %v1812 = vpack.c.b16 %v1580, %v1578
    %v1813 = vpack.c.b16 %v1581, %v1579
    %v1814 = vpack.c.b16 %v1584, %v1582
    %v1815 = vpack.c.b16 %v1585, %v1583
    %v1816 = vpack.c.b16 %v1588, %v1586
    %v1817 = vpack.c.b16 %v1589, %v1587
    %v1818 = vpack.c.b16 %v1592, %v1590
    %v1819 = vpack.c.b16 %v1593, %v1591
    %v1820 = vpack.c.b16 %v1596, %v1594
    %v1821 = vpack.c.b16 %v1597, %v1595
    %v1822 = vpack.c.b16 %v1600, %v1598
    %v1823 = vpack.c.b16 %v1601, %v1599
    %v1824 = vpack.c.b16 %v1604, %v1602
    %v1825 = vpack.c.b16 %v1605, %v1603
    %v1826 = vpack.c.b16 %v1608, %v1606
    %v1827 = vpack.c.b16 %v1609, %v1607
    %v1828 = vpack.c.b16 %v1612, %v1610
    %v1829 = vpack.c.b16 %v1613, %v1611
    %v1830 = vpack.c.b16 %v1616, %v1614
    %v1831 = vpack.c.b16 %v1617, %v1615
    %v1832 = vpack.c.b16 %v1620, %v1618
    %v1833 = vpack.c.b16 %v1621, %v1619
    %v1834 = vpack.c.b16 %v1624, %v1622
    %v1835 = vpack.c.b16 %v1625, %v1623
    %v1836 = vpack.c.b16 %v1628, %v1626
    %v1837 = vpack.c.b16 %v1629, %v1627
    %v1838 = vpack.c.b16 %v1632, %v1630
    %v1839 = vpack.c.b16 %v1633, %v1631
    %v1840 = vpack.c.b16 %v1636, %v1634
    %v1841 = vpack.c.b16 %v1637, %v1635
    %v1842 = vpack.c.b16 %v1640, %v1638
    %v1843 = vpack.c.b16 %v1641, %v1639
    %v1844 = vpack.c.b16 %v1644, %v1642
    %v1845 = vpack.c.b16 %v1645, %v1643
    %v1846 = vpack.c.b16 %v1648, %v1646
    %v1847 = vpack.c.b16 %v1649, %v1647
    %v1848 = vpack.c.b16 %v1652, %v1650
    %v1849 = vpack.c.b16 %v1653, %v1651
    %v1850 = vpack.c.b16 %v1656, %v1654
    %v1851 = vpack.c.b16 %v1657, %v1655
    %v1852 = vpack.c.b16 %v1660, %v1658
    %v1853 = vpack.c.b16 %v1661, %v1659
    %v1854 = vpack.c.b16 %v1664, %v1662
    %v1855 = vpack.c.b16 %v1665, %v1663
    %v1856 = vpack.c.b16 %v1668, %v1666
    %v1857 = vpack.c.b16 %v1669, %v1667
    %v1858 = vpack.c.b16 %v1672, %v1670
    %v1859 = vpack.c.b16 %v1673, %v1671
    %v1860 = vpack.c.b16 %v1676, %v1674
    %v1861 = vpack.c.b16 %v1677, %v1675
    %v1862 = vpack.c.b16 %v1680, %v1678
    %v1863 = vpack.c.b16 %v1681, %v1679
    %v1864 = vpack.c.b16 %v1684, %v1682
    %v1865 = vpack.c.b16 %v1685, %v1683
    %v1866 = vpack.c.b16 %v1688, %v1686
    %v1867 = vpack.c.b16 %v1689, %v1687
    %v1868 = vpack.c.b16 %v1692, %v1690
    %v1869 = vpack.c.b16 %v1693, %v1691
    %v1870 = vpack.c.b16 %v1696, %v1694
    %v1871 = vpack.c.b16 %v1697, %v1695
    %v1872 = vpack.c.b16 %v1700, %v1698
    %v1873 = vpack.c.b16 %v1701, %v1699
    %v1874 = vpack.c.b16 %v1704, %v1702
    %v1875 = vpack.c.b16 %v1705, %v1703
    %v1876 = vpack.c.b16 %v1708, %v1706
    %v1877 = vpack.c.b16 %v1709, %v1707
    %v1878 = vpack.c.b16 %v1712, %v1710
    %v1879 = vpack.c.b16 %v1713, %v1711
    %v1880 = vpack.c.b16 %v1716, %v1714
    %v1881 = vpack.c.b16 %v1717, %v1715
    %v1882 = vpack.c.b16 %v1720, %v1718
    %v1883 = vpack.c.b16 %v1721, %v1719
    %v1884 = vpack.c.b16 %v1724, %v1722
    %v1885 = vpack.c.b16 %v1725, %v1723
    %2046 = vmatprep.subr.bf16.mxu0 %v1727
    %2047 = vmatpush1.bf16.msra.mxu0 %v1726
    %2048 = vmatprep.subr.bf16.mxu0 %v1729
    %2049 = vmatpush1.bf16.msra.mxu0 %v1728
    %2050 = vmatprep.subr.bf16.mxu0 %v1731
    %2051 = vmatpush1.bf16.msra.mxu0 %v1730
    %2052 = vmatprep.subr.bf16.mxu0 %v1733
    %2053 = vmatpush1.bf16.msra.mxu0 %v1732
    %2054 = vmatprep.subr.bf16.mxu0 %v1735
    %2055 = vmatpush1.bf16.msra.mxu0 %v1734
    %2056 = vmatprep.subr.bf16.mxu0 %v1737
    %2057 = vmatpush1.bf16.msra.mxu0 %v1736
    %2058 = vmatprep.subr.bf16.mxu0 %v1739
    %2059 = vmatpush1.bf16.msra.mxu0 %v1738
    %2060 = vmatprep.subr.bf16.mxu0 %v1741
    %2061 = vmatpush1.bf16.msra.mxu0 %v1740
    %2062 = vmatprep.subr.bf16.mxu0 %v1743
    %2063 = vmatpush1.bf16.msra.mxu0 %v1742
    %2064 = vmatprep.subr.bf16.mxu0 %v1745
    %2065 = vmatpush1.bf16.msra.mxu0 %v1744
    %2066 = vmatprep.subr.bf16.mxu0 %v1747
    %2067 = vmatpush1.bf16.msra.mxu0 %v1746
    %2068 = vmatprep.subr.bf16.mxu0 %v1749
    %2069 = vmatpush1.bf16.msra.mxu0 %v1748
    %2070 = vmatprep.subr.bf16.mxu0 %v1751
    %2071 = vmatpush1.bf16.msra.mxu0 %v1750
    %2072 = vmatprep.subr.bf16.mxu0 %v1753
    %2073 = vmatpush1.bf16.msra.mxu0 %v1752
    %2074 = vmatprep.subr.bf16.mxu0 %v1755
    %2075 = vmatpush1.bf16.msra.mxu0 %v1754
    %2076 = vmatprep.subr.bf16.mxu0 %v1757
    %2077 = vmatpush1.bf16.msra.mxu0 %v1756
    %2078 = vmatprep.mubr.bf16.mxu0 %v1055
    %2079 = vmatmul.mubr.bf16.gmra.mrb[0].mxu0 %v1054
    %v2080 = vpop.f32.mrb[0].mxu0
    %v2081 = vadd.f32 %v1239, %v2080
    %v2082 = vpop.f32.mrb[0].mxu0
    %v2083 = vadd.f32 %v1243, %v2082
    %v2084 = vpop.f32.mrb[0].mxu0
    %v2085 = vadd.f32 %v1239, %v2084
    %v2086 = vpop.f32.mrb[0].mxu0
    %v2087 = vadd.f32 %v1243, %v2086
    %2088 = vmatprep.mubr.bf16.mxu0 %v1065
    %2089 = vmatmul.mubr.bf16.gmra.mrb[0].mxu0 %v1064
    %v2090 = vpop.f32.mrb[0].mxu0
    %v2091 = vadd.f32 %v1239, %v2090
    %v2092 = vpop.f32.mrb[0].mxu0
    %v2093 = vadd.f32 %v1243, %v2092
    %v2094 = vpop.f32.mrb[0].mxu0
    %v2095 = vpop.f32.mrb[0].mxu0
    %2096 = vdwg.mxu0
    %2097 = vmatprep.subr.bf16.mxu0 %v1759
    %2098 = vmatpush1.bf16.msra.mxu0 %v1758
    %2099 = vmatprep.subr.bf16.mxu0 %v1761
    %2100 = vmatpush1.bf16.msra.mxu0 %v1760
    %2101 = vmatprep.subr.bf16.mxu0 %v1763
    %2102 = vmatpush1.bf16.msra.mxu0 %v1762
    %2103 = vmatprep.subr.bf16.mxu0 %v1765
    %2104 = vmatpush1.bf16.msra.mxu0 %v1764
    %2105 = vmatprep.subr.bf16.mxu0 %v1767
    %2106 = vmatpush1.bf16.msra.mxu0 %v1766
    %2107 = vmatprep.subr.bf16.mxu0 %v1769
    %2108 = vmatpush1.bf16.msra.mxu0 %v1768
    %2109 = vmatprep.subr.bf16.mxu0 %v1771
    %2110 = vmatpush1.bf16.msra.mxu0 %v1770
    %2111 = vmatprep.subr.bf16.mxu0 %v1773
    %2112 = vmatpush1.bf16.msra.mxu0 %v1772
    %2113 = vmatprep.subr.bf16.mxu0 %v1775
    %2114 = vmatpush1.bf16.msra.mxu0 %v1774
    %2115 = vmatprep.subr.bf16.mxu0 %v1777
    %2116 = vmatpush1.bf16.msra.mxu0 %v1776
    %2117 = vmatprep.subr.bf16.mxu0 %v1779
    %2118 = vmatpush1.bf16.msra.mxu0 %v1778
    %2119 = vmatprep.subr.bf16.mxu0 %v1781
    %2120 = vmatpush1.bf16.msra.mxu0 %v1780
    %2121 = vmatprep.subr.bf16.mxu0 %v1783
    %2122 = vmatpush1.bf16.msra.mxu0 %v1782
    %2123 = vmatprep.subr.bf16.mxu0 %v1785
    %2124 = vmatpush1.bf16.msra.mxu0 %v1784
    %2125 = vmatprep.subr.bf16.mxu0 %v1787
    %2126 = vmatpush1.bf16.msra.mxu0 %v1786
    %2127 = vmatprep.subr.bf16.mxu0 %v1789
    %2128 = vmatpush1.bf16.msra.mxu0 %v1788
    %2129 = vmatprep.mubr.bf16.mxu0 %v1057
    %2130 = vmatmul.mubr.bf16.gmra.mrb[0].mxu0 %v1056
    %v2131 = vpop.f32.mrb[0].mxu0
    %v2132 = vadd.f32 %v2081, %v2131
    %v2133 = vpop.f32.mrb[0].mxu0
    %v2134 = vadd.f32 %v2083, %v2133
    %v2135 = vpop.f32.mrb[0].mxu0
    %v2136 = vadd.f32 %v2085, %v2135
    %v2137 = vpop.f32.mrb[0].mxu0
    %v2138 = vadd.f32 %v2087, %v2137
    %2139 = vmatprep.mubr.bf16.mxu0 %v1067
    %2140 = vmatmul.mubr.bf16.gmra.mrb[0].mxu0 %v1066
    %v2141 = vpop.f32.mrb[0].mxu0
    %v2142 = vadd.f32 %v2091, %v2141
    %v2143 = vpop.f32.mrb[0].mxu0
    %v2144 = vadd.f32 %v2093, %v2143
    %v2145 = vpop.f32.mrb[0].mxu0
    %v2146 = vpop.f32.mrb[0].mxu0
    %2147 = vdwg.mxu0
    %2148 = vmatprep.subr.bf16.mxu0 %v1791
    %2149 = vmatpush1.bf16.msra.mxu0 %v1790
    %2150 = vmatprep.subr.bf16.mxu0 %v1793
    %2151 = vmatpush1.bf16.msra.mxu0 %v1792
    %2152 = vmatprep.subr.bf16.mxu0 %v1795
    %2153 = vmatpush1.bf16.msra.mxu0 %v1794
    %2154 = vmatprep.subr.bf16.mxu0 %v1797
    %2155 = vmatpush1.bf16.msra.mxu0 %v1796
    %2156 = vmatprep.subr.bf16.mxu0 %v1799
    %2157 = vmatpush1.bf16.msra.mxu0 %v1798
    %2158 = vmatprep.subr.bf16.mxu0 %v1801
    %2159 = vmatpush1.bf16.msra.mxu0 %v1800
    %2160 = vmatprep.subr.bf16.mxu0 %v1803
    %2161 = vmatpush1.bf16.msra.mxu0 %v1802
    %2162 = vmatprep.subr.bf16.mxu0 %v1805
    %2163 = vmatpush1.bf16.msra.mxu0 %v1804
    %2164 = vmatprep.subr.bf16.mxu0 %v1807
    %2165 = vmatpush1.bf16.msra.mxu0 %v1806
    %2166 = vmatprep.subr.bf16.mxu0 %v1809
    %2167 = vmatpush1.bf16.msra.mxu0 %v1808
    %2168 = vmatprep.subr.bf16.mxu0 %v1811
    %2169 = vmatpush1.bf16.msra.mxu0 %v1810
    %2170 = vmatprep.subr.bf16.mxu0 %v1813
    %2171 = vmatpush1.bf16.msra.mxu0 %v1812
    %2172 = vmatprep.subr.bf16.mxu0 %v1815
    %2173 = vmatpush1.bf16.msra.mxu0 %v1814
    %2174 = vmatprep.subr.bf16.mxu0 %v1817
    %2175 = vmatpush1.bf16.msra.mxu0 %v1816
    %2176 = vmatprep.subr.bf16.mxu0 %v1819
    %2177 = vmatpush1.bf16.msra.mxu0 %v1818
    %2178 = vmatprep.subr.bf16.mxu0 %v1821
    %2179 = vmatpush1.bf16.msra.mxu0 %v1820
    %2180 = vmatprep.mubr.bf16.mxu0 %v1059
    %2181 = vmatmul.mubr.bf16.gmra.mrb[0].mxu0 %v1058
    %v2182 = vpop.f32.mrb[0].mxu0
    %v2183 = vadd.f32 %v2132, %v2182
    %v2184 = vpop.f32.mrb[0].mxu0
    %v2185 = vadd.f32 %v2134, %v2184
    %v2186 = vpop.f32.mrb[0].mxu0
    %v2187 = vadd.f32 %v2136, %v2186
    %v2188 = vpop.f32.mrb[0].mxu0
    %v2189 = vadd.f32 %v2138, %v2188
    %2190 = vmatprep.mubr.bf16.mxu0 %v1069
    %2191 = vmatmul.mubr.bf16.gmra.mrb[0].mxu0 %v1068
    %v2192 = vpop.f32.mrb[0].mxu0
    %v2193 = vadd.f32 %v2142, %v2192
    %v2194 = vpop.f32.mrb[0].mxu0
    %v2195 = vadd.f32 %v2144, %v2194
    %v2196 = vpop.f32.mrb[0].mxu0
    %v2197 = vpop.f32.mrb[0].mxu0
    %2198 = vdwg.mxu0
    %2199 = vmatprep.subr.bf16.mxu0 %v1823
    %2200 = vmatpush1.bf16.msra.mxu0 %v1822
    %2201 = vmatprep.subr.bf16.mxu0 %v1825
    %2202 = vmatpush1.bf16.msra.mxu0 %v1824
    %2203 = vmatprep.subr.bf16.mxu0 %v1827
    %2204 = vmatpush1.bf16.msra.mxu0 %v1826
    %2205 = vmatprep.subr.bf16.mxu0 %v1829
    %2206 = vmatpush1.bf16.msra.mxu0 %v1828
    %2207 = vmatprep.subr.bf16.mxu0 %v1831
    %2208 = vmatpush1.bf16.msra.mxu0 %v1830
    %2209 = vmatprep.subr.bf16.mxu0 %v1833
    %2210 = vmatpush1.bf16.msra.mxu0 %v1832
    %2211 = vmatprep.subr.bf16.mxu0 %v1835
    %2212 = vmatpush1.bf16.msra.mxu0 %v1834
    %2213 = vmatprep.subr.bf16.mxu0 %v1837
    %2214 = vmatpush1.bf16.msra.mxu0 %v1836
    %2215 = vmatprep.subr.bf16.mxu0 %v1839
    %2216 = vmatpush1.bf16.msra.mxu0 %v1838
    %2217 = vmatprep.subr.bf16.mxu0 %v1841
    %2218 = vmatpush1.bf16.msra.mxu0 %v1840
    %2219 = vmatprep.subr.bf16.mxu0 %v1843
    %2220 = vmatpush1.bf16.msra.mxu0 %v1842
    %2221 = vmatprep.subr.bf16.mxu0 %v1845
    %2222 = vmatpush1.bf16.msra.mxu0 %v1844
    %2223 = vmatprep.subr.bf16.mxu0 %v1847
    %2224 = vmatpush1.bf16.msra.mxu0 %v1846
    %2225 = vmatprep.subr.bf16.mxu0 %v1849
    %2226 = vmatpush1.bf16.msra.mxu0 %v1848
    %2227 = vmatprep.subr.bf16.mxu0 %v1851
    %2228 = vmatpush1.bf16.msra.mxu0 %v1850
    %2229 = vmatprep.subr.bf16.mxu0 %v1853
    %2230 = vmatpush1.bf16.msra.mxu0 %v1852
    %2231 = vmatprep.mubr.bf16.mxu0 %v1061
    %2232 = vmatmul.mubr.bf16.gmra.mrb[0].mxu0 %v1060
    %v2233 = vpop.f32.mrb[0].mxu0
    %v2234 = vadd.f32 %v2183, %v2233
    %v2235 = vpop.f32.mrb[0].mxu0
    %v2236 = vadd.f32 %v2185, %v2235
    %v2237 = vpop.f32.mrb[0].mxu0
    %v2238 = vadd.f32 %v2187, %v2237
    %v2239 = vpop.f32.mrb[0].mxu0
    %v2240 = vadd.f32 %v2189, %v2239
    %2241 = vmatprep.mubr.bf16.mxu0 %v1071
    %2242 = vmatmul.mubr.bf16.gmra.mrb[0].mxu0 %v1070
    %v2243 = vpop.f32.mrb[0].mxu0
    %v2244 = vadd.f32 %v2193, %v2243
    %v2245 = vpop.f32.mrb[0].mxu0
    %v2246 = vadd.f32 %v2195, %v2245
    %v2247 = vpop.f32.mrb[0].mxu0
    %v2248 = vpop.f32.mrb[0].mxu0
    %2249 = vdwg.mxu0
    %2250 = vmatprep.subr.bf16.mxu0 %v1855
    %2251 = vmatpush1.bf16.msra.mxu0 %v1854
    %2252 = vmatprep.subr.bf16.mxu0 %v1857
    %2253 = vmatpush1.bf16.msra.mxu0 %v1856
    %2254 = vmatprep.subr.bf16.mxu0 %v1859
    %2255 = vmatpush1.bf16.msra.mxu0 %v1858
    %2256 = vmatprep.subr.bf16.mxu0 %v1861
    %2257 = vmatpush1.bf16.msra.mxu0 %v1860
    %2258 = vmatprep.subr.bf16.mxu0 %v1863
    %2259 = vmatpush1.bf16.msra.mxu0 %v1862
    %2260 = vmatprep.subr.bf16.mxu0 %v1865
    %2261 = vmatpush1.bf16.msra.mxu0 %v1864
    %2262 = vmatprep.subr.bf16.mxu0 %v1867
    %2263 = vmatpush1.bf16.msra.mxu0 %v1866
    %2264 = vmatprep.subr.bf16.mxu0 %v1869
    %2265 = vmatpush1.bf16.msra.mxu0 %v1868
    %2266 = vmatprep.subr.bf16.mxu0 %v1871
    %2267 = vmatpush1.bf16.msra.mxu0 %v1870
    %2268 = vmatprep.subr.bf16.mxu0 %v1873
    %2269 = vmatpush1.bf16.msra.mxu0 %v1872
    %2270 = vmatprep.subr.bf16.mxu0 %v1875
    %2271 = vmatpush1.bf16.msra.mxu0 %v1874
    %2272 = vmatprep.subr.bf16.mxu0 %v1877
    %2273 = vmatpush1.bf16.msra.mxu0 %v1876
    %2274 = vmatprep.subr.bf16.mxu0 %v1879
    %2275 = vmatpush1.bf16.msra.mxu0 %v1878
    %2276 = vmatprep.subr.bf16.mxu0 %v1881
    %2277 = vmatpush1.bf16.msra.mxu0 %v1880
    %2278 = vmatprep.subr.bf16.mxu0 %v1883
    %2279 = vmatpush1.bf16.msra.mxu0 %v1882
    %2280 = vmatprep.subr.bf16.mxu0 %v1885
    %2281 = vmatpush1.bf16.msra.mxu0 %v1884
    %2282 = vmatprep.mubr.bf16.mxu0 %v1063
    %2283 = vmatmul.mubr.bf16.gmra.mrb[0].mxu0 %v1062
    %v2284 = vpop.f32.mrb[0].mxu0
    %v2285 = vadd.f32 %v2234, %v2284
    %v2286 = vpop.f32.mrb[0].mxu0
    %v2287 = vadd.f32 %v2236, %v2286
    %v2288 = vpop.f32.mrb[0].mxu0
    %v2289 = vadd.f32 %v2238, %v2288
    %v2290 = vpop.f32.mrb[0].mxu0
    %v2291 = vadd.f32 %v2240, %v2290
    %2292 = vmatprep.mubr.bf16.mxu0 %v1073
    %2293 = vmatmul.mubr.bf16.gmra.mrb[0].mxu0 %v1072
    %v2294 = vpop.f32.mrb[0].mxu0
    %v2295 = vadd.f32 %v2244, %v2294
    %v2296 = vpop.f32.mrb[0].mxu0
    %v2297 = vadd.f32 %v2246, %v2296
    %v2298 = vpop.f32.mrb[0].mxu0
    %v2299 = vpop.f32.mrb[0].mxu0
    %2300 = vdwg.mxu0
    %v2301 = vmax.f32 %v2285, 0.0
    %v2302 = vmax.f32 %v2287, 0.0
    %v2303 = vmax.f32 %v2289, 0.0
    %v2304 = vmax.f32 %v2291, 0.0
    %v2305 = vmax.f32 %v2295, 0.0
    %v2306 = vmax.f32 %v2297, 0.0
    %v2313 = vrot.slane %v2301, 1
    %v2314 = vrot.slane %v2303, 1
    %v2315 = vsel %vm987, %v2313, %v2314
    %v2316 = vrot.slane %v2302, 1
    %v2317 = vrot.slane %v2304, 1
    %v2318 = vsel %vm987, %v2316, %v2317
    %v2319 = vrot.slane %v2305, 1
    %v2320 = vsel %vm987, %v2314, %v2319
    %v2321 = vrot.slane %v2306, 1
    %v2322 = vsel %vm987, %v2317, %v2321
    %v2329 = vrot.slane %v2301, 2
    %v2330 = vrot.slane %v2303, 2
    %v2331 = vsel %vm1004, %v2329, %v2330
    %v2332 = vrot.slane %v2302, 2
    %v2333 = vrot.slane %v2304, 2
    %v2334 = vsel %vm1004, %v2332, %v2333
    %v2335 = vrot.slane %v2305, 2
    %v2336 = vsel %vm1004, %v2330, %v2335
    %v2337 = vrot.slane %v2306, 2
    %v2338 = vsel %vm1004, %v2333, %v2337
    %v2345 = vrot.slane %v2301, 3
    %v2346 = vrot.slane %v2303, 3
    %v2347 = vsel %vm1021, %v2345, %v2346
    %v2348 = vrot.slane %v2302, 3
    %v2349 = vrot.slane %v2304, 3
    %v2350 = vsel %vm1021, %v2348, %v2349
    %v2351 = vrot.slane %v2305, 3
    %v2352 = vsel %vm1021, %v2346, %v2351
    %v2353 = vrot.slane %v2306, 3
    %v2354 = vsel %vm1021, %v2349, %v2353
    %v2361 = vpack.c.bf16 %v2303, %v2301
    %v2362 = vpack.c.bf16 %v2304, %v2302
    %v2363 = vpack.c.bf16 %v2320, %v2315
    %v2364 = vpack.c.bf16 %v2322, %v2318
    %v2365 = vpack.c.bf16 %v2336, %v2331
    %v2366 = vpack.c.bf16 %v2338, %v2334
    %v2367 = vpack.c.bf16 %v2352, %v2347
    %v2368 = vpack.c.bf16 %v2354, %v2350
    %v2369 = vpack.c.bf16 %v2305, %v2305
    %v2370 = vpack.c.bf16 %v2306, %v2306
    %v2371 = vpack.c.bf16 %v2319, %v2319
    %v2372 = vpack.c.bf16 %v2321, %v2321
    %v2373 = vpack.c.bf16 %v2335, %v2335
    %v2374 = vpack.c.bf16 %v2337, %v2337
    %v2375 = vpack.c.bf16 %v2351, %v2351
    %v2376 = vpack.c.bf16 %v2353, %v2353
    %v2377 = vld [vmem:[%s7] sm:$0xf]
    %v2378 = vld [vmem:[%s7 + $0x4] sm:$0xf]
    %v2379 = vld [vmem:[%s7 + $0x8] sm:$0xf]
    %v2380 = vld [vmem:[%s7 + $0xc] sm:$0xf]
    %v2381 = vld [vmem:[%s7 + $0x10] sm:$0xf]
    %v2382 = vld [vmem:[%s7 + $0x14] sm:$0xf]
    %v2383 = vld [vmem:[%s7 + $0x18] sm:$0xf]
    %v2384 = vld [vmem:[%s7 + $0x1c] sm:$0xf]
    %v2385 = vld [vmem:[%s7 + $0x20] sm:$0xf]
    %v2386 = vld [vmem:[%s7 + $0x24] sm:$0xf]
    %v2387 = vld [vmem:[%s7 + $0x28] sm:$0xf]
    %v2388 = vld [vmem:[%s7 + $0x2c] sm:$0xf]
    %v2389 = vld [vmem:[%s7 + $0x30] sm:$0xf]
    %v2390 = vld [vmem:[%s7 + $0x34] sm:$0xf]
    %v2391 = vld [vmem:[%s7 + $0x38] sm:$0xf]
    %v2392 = vld [vmem:[%s7 + $0x3c] sm:$0xf]
    %v2393 = vld [vmem:[%s7 + $0x40] sm:$0xf]
    %v2394 = vld [vmem:[%s7 + $0x44] sm:$0xf]
    %v2395 = vld [vmem:[%s7 + $0x48] sm:$0xf]
    %v2396 = vld [vmem:[%s7 + $0x4c] sm:$0xf]
    %v2397 = vld [vmem:[%s7 + $0x50] sm:$0xf]
    %v2398 = vld [vmem:[%s7 + $0x54] sm:$0xf]
    %v2399 = vld [vmem:[%s7 + $0x58] sm:$0xf]
    %v2400 = vld [vmem:[%s7 + $0x5c] sm:$0xf]
    %v2401 = vld [vmem:[%s7 + $0x60] sm:$0xf]
    %v2402 = vld [vmem:[%s7 + $0x64] sm:$0xf]
    %v2403 = vld [vmem:[%s7 + $0x68] sm:$0xf]
    %v2404 = vld [vmem:[%s7 + $0x6c] sm:$0xf]
    %v2405 = vld [vmem:[%s7 + $0x70] sm:$0xf]
    %v2406 = vld [vmem:[%s7 + $0x74] sm:$0xf]
    %v2407 = vld [vmem:[%s7 + $0x78] sm:$0xf]
    %v2408 = vld [vmem:[%s7 + $0x7c] sm:$0xf]
    %v2409 = vld [vmem:[%s7 + $0x80] sm:$0xf]
    %v2410 = vld [vmem:[%s7 + $0x84] sm:$0xf]
    %v2411 = vld [vmem:[%s7 + $0x88] sm:$0xf]
    %v2412 = vld [vmem:[%s7 + $0x8c] sm:$0xf]
    %v2413 = vld [vmem:[%s7 + $0x90] sm:$0xf]
    %v2414 = vld [vmem:[%s7 + $0x94] sm:$0xf]
    %v2415 = vld [vmem:[%s7 + $0x98] sm:$0xf]
    %v2416 = vld [vmem:[%s7 + $0x9c] sm:$0xf]
    %v2417 = vld [vmem:[%s7 + $0xa0] sm:$0xf]
    %v2418 = vld [vmem:[%s7 + $0xa4] sm:$0xf]
    %v2419 = vld [vmem:[%s7 + $0xa8] sm:$0xf]
    %v2420 = vld [vmem:[%s7 + $0xac] sm:$0xf]
    %v2421 = vld [vmem:[%s7 + $0xb0] sm:$0xf]
    %v2422 = vld [vmem:[%s7 + $0xb4] sm:$0xf]
    %v2423 = vld [vmem:[%s7 + $0xb8] sm:$0xf]
    %v2424 = vld [vmem:[%s7 + $0xbc] sm:$0xf]
    %v2425 = vld [vmem:[%s7 + $0xc0] sm:$0xf]
    %v2426 = vld [vmem:[%s7 + $0xc4] sm:$0xf]
    %v2427 = vld [vmem:[%s7 + $0xc8] sm:$0xf]
    %v2428 = vld [vmem:[%s7 + $0xcc] sm:$0xf]
    %v2429 = vld [vmem:[%s7 + $0xd0] sm:$0xf]
    %v2430 = vld [vmem:[%s7 + $0xd4] sm:$0xf]
    %v2431 = vld [vmem:[%s7 + $0xd8] sm:$0xf]
    %v2432 = vld [vmem:[%s7 + $0xdc] sm:$0xf]
    %v2433 = vld [vmem:[%s7 + $0xe0] sm:$0xf]
    %v2434 = vld [vmem:[%s7 + $0xe4] sm:$0xf]
    %v2435 = vld [vmem:[%s7 + $0xe8] sm:$0xf]
    %v2436 = vld [vmem:[%s7 + $0xec] sm:$0xf]
    %v2437 = vld [vmem:[%s7 + $0xf0] sm:$0xf]
    %v2438 = vld [vmem:[%s7 + $0xf4] sm:$0xf]
    %v2439 = vld [vmem:[%s7 + $0xf8] sm:$0xf]
    %v2440 = vld [vmem:[%s7 + $0xfc] sm:$0xf]
    %v2441 = vld [vmem:[%s7 + $0x100] sm:$0xf]
    %v2442 = vld [vmem:[%s7 + $0x104] sm:$0xf]
    %v2443 = vld [vmem:[%s7 + $0x108] sm:$0xf]
    %v2444 = vld [vmem:[%s7 + $0x10c] sm:$0xf]
    %v2445 = vld [vmem:[%s7 + $0x110] sm:$0xf]
    %v2446 = vld [vmem:[%s7 + $0x114] sm:$0xf]
    %v2447 = vld [vmem:[%s7 + $0x118] sm:$0xf]
    %v2448 = vld [vmem:[%s7 + $0x11c] sm:$0xf]
    %v2449 = vld [vmem:[%s7 + $0x120] sm:$0xf]
    %v2450 = vld [vmem:[%s7 + $0x124] sm:$0xf]
    %v2451 = vld [vmem:[%s7 + $0x128] sm:$0xf]
    %v2452 = vld [vmem:[%s7 + $0x12c] sm:$0xf]
    %v2453 = vld [vmem:[%s7 + $0x130] sm:$0xf]
    %v2454 = vld [vmem:[%s7 + $0x134] sm:$0xf]
    %v2455 = vld [vmem:[%s7 + $0x138] sm:$0xf]
    %v2456 = vld [vmem:[%s7 + $0x13c] sm:$0xf]
    %v2457 = vld [vmem:[%s7 + $0x140] sm:$0xf]
    %v2458 = vld [vmem:[%s7 + $0x144] sm:$0xf]
    %v2459 = vld [vmem:[%s7 + $0x148] sm:$0xf]
    %v2460 = vld [vmem:[%s7 + $0x14c] sm:$0xf]
    %v2461 = vld [vmem:[%s7 + $0x150] sm:$0xf]
    %v2462 = vld [vmem:[%s7 + $0x154] sm:$0xf]
    %v2463 = vld [vmem:[%s7 + $0x158] sm:$0xf]
    %v2464 = vld [vmem:[%s7 + $0x15c] sm:$0xf]
    %v2465 = vld [vmem:[%s7 + $0x160] sm:$0xf]
    %v2466 = vld [vmem:[%s7 + $0x164] sm:$0xf]
    %v2467 = vld [vmem:[%s7 + $0x168] sm:$0xf]
    %v2468 = vld [vmem:[%s7 + $0x16c] sm:$0xf]
    %v2469 = vld [vmem:[%s7 + $0x170] sm:$0xf]
    %v2470 = vld [vmem:[%s7 + $0x174] sm:$0xf]
    %v2471 = vld [vmem:[%s7 + $0x178] sm:$0xf]
    %v2472 = vld [vmem:[%s7 + $0x17c] sm:$0xf]
    %v2473 = vld [vmem:[%s7 + $0x180] sm:$0xf]
    %v2474 = vld [vmem:[%s7 + $0x184] sm:$0xf]
    %v2475 = vld [vmem:[%s7 + $0x188] sm:$0xf]
    %v2476 = vld [vmem:[%s7 + $0x18c] sm:$0xf]
    %v2477 = vld [vmem:[%s7 + $0x190] sm:$0xf]
    %v2478 = vld [vmem:[%s7 + $0x194] sm:$0xf]
    %v2479 = vld [vmem:[%s7 + $0x198] sm:$0xf]
    %v2480 = vld [vmem:[%s7 + $0x19c] sm:$0xf]
    %v2481 = vld [vmem:[%s7 + $0x1a0] sm:$0xf]
    %v2482 = vld [vmem:[%s7 + $0x1a4] sm:$0xf]
    %v2483 = vld [vmem:[%s7 + $0x1a8] sm:$0xf]
    %v2484 = vld [vmem:[%s7 + $0x1ac] sm:$0xf]
    %v2485 = vld [vmem:[%s7 + $0x1b0] sm:$0xf]
    %v2486 = vld [vmem:[%s7 + $0x1b4] sm:$0xf]
    %v2487 = vld [vmem:[%s7 + $0x1b8] sm:$0xf]
    %v2488 = vld [vmem:[%s7 + $0x1bc] sm:$0xf]
    %v2489 = vld [vmem:[%s7 + $0x1c0] sm:$0xf]
    %v2490 = vld [vmem:[%s7 + $0x1c4] sm:$0xf]
    %v2491 = vld [vmem:[%s7 + $0x1c8] sm:$0xf]
    %v2492 = vld [vmem:[%s7 + $0x1cc] sm:$0xf]
    %v2493 = vld [vmem:[%s7 + $0x1d0] sm:$0xf]
    %v2494 = vld [vmem:[%s7 + $0x1d4] sm:$0xf]
    %v2495 = vld [vmem:[%s7 + $0x1d8] sm:$0xf]
    %v2496 = vld [vmem:[%s7 + $0x1dc] sm:$0xf]
    %v2497 = vld [vmem:[%s7 + $0x1e0] sm:$0xf]
    %v2498 = vld [vmem:[%s7 + $0x1e4] sm:$0xf]
    %v2499 = vld [vmem:[%s7 + $0x1e8] sm:$0xf]
    %v2500 = vld [vmem:[%s7 + $0x1ec] sm:$0xf]
    %v2501 = vld [vmem:[%s7 + $0x1f0] sm:$0xf]
    %v2502 = vld [vmem:[%s7 + $0x1f4] sm:$0xf]
    %v2503 = vld [vmem:[%s7 + $0x1f8] sm:$0xf]
    %v2504 = vld [vmem:[%s7 + $0x1fc] sm:$0xf]
    %v2505 = vld [vmem:[%s8] sm:$0x1]
    %v2507 = vlaneseq
    %v2508 = vshrl.u32 %v2507, 7
    %v2509 = vsub.s32 0, %v2508
    %v2510 = vrot.slane %v2505, %v2509
    %v2640 = vunpack.c.l.b16 %v2377
    %v2641 = vunpack.c.l.b16 %v2378
    %v2642 = vunpack.c.l.b16 %v2379
    %v2643 = vunpack.c.l.b16 %v2380
    %v2644 = vunpack.c.l.b16 %v2381
    %v2645 = vunpack.c.l.b16 %v2382
    %v2646 = vunpack.c.l.b16 %v2383
    %v2647 = vunpack.c.l.b16 %v2384
    %v2648 = vunpack.c.l.b16 %v2385
    %v2649 = vunpack.c.l.b16 %v2386
    %v2650 = vunpack.c.l.b16 %v2387
    %v2651 = vunpack.c.l.b16 %v2388
    %v2652 = vunpack.c.l.b16 %v2389
    %v2653 = vunpack.c.l.b16 %v2390
    %v2654 = vunpack.c.l.b16 %v2391
    %v2655 = vunpack.c.l.b16 %v2392
    %v2656 = vunpack.c.l.b16 %v2393
    %v2657 = vunpack.c.l.b16 %v2394
    %v2658 = vunpack.c.l.b16 %v2395
    %v2659 = vunpack.c.l.b16 %v2396
    %v2660 = vunpack.c.l.b16 %v2397
    %v2661 = vunpack.c.l.b16 %v2398
    %v2662 = vunpack.c.l.b16 %v2399
    %v2663 = vunpack.c.l.b16 %v2400
    %v2664 = vunpack.c.l.b16 %v2401
    %v2665 = vunpack.c.l.b16 %v2402
    %v2666 = vunpack.c.l.b16 %v2403
    %v2667 = vunpack.c.l.b16 %v2404
    %v2668 = vunpack.c.l.b16 %v2405
    %v2669 = vunpack.c.l.b16 %v2406
    %v2670 = vunpack.c.l.b16 %v2407
    %v2671 = vunpack.c.l.b16 %v2408
    %v2672 = vunpack.c.l.b16 %v2409
    %v2673 = vunpack.c.l.b16 %v2410
    %v2674 = vunpack.c.l.b16 %v2411
    %v2675 = vunpack.c.l.b16 %v2412
    %v2676 = vunpack.c.l.b16 %v2413
    %v2677 = vunpack.c.l.b16 %v2414
    %v2678 = vunpack.c.l.b16 %v2415
    %v2679 = vunpack.c.l.b16 %v2416
    %v2680 = vunpack.c.l.b16 %v2417
    %v2681 = vunpack.c.l.b16 %v2418
    %v2682 = vunpack.c.l.b16 %v2419
    %v2683 = vunpack.c.l.b16 %v2420
    %v2684 = vunpack.c.l.b16 %v2421
    %v2685 = vunpack.c.l.b16 %v2422
    %v2686 = vunpack.c.l.b16 %v2423
    %v2687 = vunpack.c.l.b16 %v2424
    %v2688 = vunpack.c.l.b16 %v2425
    %v2689 = vunpack.c.l.b16 %v2426
    %v2690 = vunpack.c.l.b16 %v2427
    %v2691 = vunpack.c.l.b16 %v2428
    %v2692 = vunpack.c.l.b16 %v2429
    %v2693 = vunpack.c.l.b16 %v2430
    %v2694 = vunpack.c.l.b16 %v2431
    %v2695 = vunpack.c.l.b16 %v2432
    %v2696 = vunpack.c.l.b16 %v2433
    %v2697 = vunpack.c.l.b16 %v2434
    %v2698 = vunpack.c.l.b16 %v2435
    %v2699 = vunpack.c.l.b16 %v2436
    %v2700 = vunpack.c.l.b16 %v2437
    %v2701 = vunpack.c.l.b16 %v2438
    %v2702 = vunpack.c.l.b16 %v2439
    %v2703 = vunpack.c.l.b16 %v2440
    %v2704 = vunpack.c.l.b16 %v2441
    %v2705 = vunpack.c.l.b16 %v2442
    %v2706 = vunpack.c.l.b16 %v2443
    %v2707 = vunpack.c.l.b16 %v2444
    %v2708 = vunpack.c.l.b16 %v2445
    %v2709 = vunpack.c.l.b16 %v2446
    %v2710 = vunpack.c.l.b16 %v2447
    %v2711 = vunpack.c.l.b16 %v2448
    %v2712 = vunpack.c.l.b16 %v2449
    %v2713 = vunpack.c.l.b16 %v2450
    %v2714 = vunpack.c.l.b16 %v2451
    %v2715 = vunpack.c.l.b16 %v2452
    %v2716 = vunpack.c.l.b16 %v2453
    %v2717 = vunpack.c.l.b16 %v2454
    %v2718 = vunpack.c.l.b16 %v2455
    %v2719 = vunpack.c.l.b16 %v2456
    %v2720 = vunpack.c.l.b16 %v2457
    %v2721 = vunpack.c.l.b16 %v2458
    %v2722 = vunpack.c.l.b16 %v2459
    %v2723 = vunpack.c.l.b16 %v2460
    %v2724 = vunpack.c.l.b16 %v2461
    %v2725 = vunpack.c.l.b16 %v2462
    %v2726 = vunpack.c.l.b16 %v2463
    %v2727 = vunpack.c.l.b16 %v2464
    %v2728 = vunpack.c.l.b16 %v2465
    %v2729 = vunpack.c.l.b16 %v2466
    %v2730 = vunpack.c.l.b16 %v2467
    %v2731 = vunpack.c.l.b16 %v2468
    %v2732 = vunpack.c.l.b16 %v2469
    %v2733 = vunpack.c.l.b16 %v2470
    %v2734 = vunpack.c.l.b16 %v2471
    %v2735 = vunpack.c.l.b16 %v2472
    %v2736 = vunpack.c.l.b16 %v2473
    %v2737 = vunpack.c.l.b16 %v2474
    %v2738 = vunpack.c.l.b16 %v2475
    %v2739 = vunpack.c.l.b16 %v2476
    %v2740 = vunpack.c.l.b16 %v2477
    %v2741 = vunpack.c.l.b16 %v2478
    %v2742 = vunpack.c.l.b16 %v2479
    %v2743 = vunpack.c.l.b16 %v2480
    %v2744 = vunpack.c.l.b16 %v2481
    %v2745 = vunpack.c.l.b16 %v2482
    %v2746 = vunpack.c.l.b16 %v2483
    %v2747 = vunpack.c.l.b16 %v2484
    %v2748 = vunpack.c.l.b16 %v2485
    %v2749 = vunpack.c.l.b16 %v2486
    %v2750 = vunpack.c.l.b16 %v2487
    %v2751 = vunpack.c.l.b16 %v2488
    %v2752 = vunpack.c.l.b16 %v2489
    %v2753 = vunpack.c.l.b16 %v2490
    %v2754 = vunpack.c.l.b16 %v2491
    %v2755 = vunpack.c.l.b16 %v2492
    %v2756 = vunpack.c.l.b16 %v2493
    %v2757 = vunpack.c.l.b16 %v2494
    %v2758 = vunpack.c.l.b16 %v2495
    %v2759 = vunpack.c.l.b16 %v2496
    %v2760 = vunpack.c.l.b16 %v2497
    %v2761 = vunpack.c.l.b16 %v2498
    %v2762 = vunpack.c.l.b16 %v2499
    %v2763 = vunpack.c.l.b16 %v2500
    %v2764 = vunpack.c.l.b16 %v2501
    %v2765 = vunpack.c.l.b16 %v2502
    %v2766 = vunpack.c.l.b16 %v2503
    %v2767 = vunpack.c.l.b16 %v2504
    %v2768 = vpack.c.b16 %v2641, %v2640
    %v2769 = vpack.c.b16 %v2643, %v2642
    %v2770 = vpack.c.b16 %v2645, %v2644
    %v2771 = vpack.c.b16 %v2647, %v2646
    %v2772 = vpack.c.b16 %v2649, %v2648
    %v2773 = vpack.c.b16 %v2651, %v2650
    %v2774 = vpack.c.b16 %v2653, %v2652
    %v2775 = vpack.c.b16 %v2655, %v2654
    %v2776 = vpack.c.b16 %v2657, %v2656
    %v2777 = vpack.c.b16 %v2659, %v2658
    %v2778 = vpack.c.b16 %v2661, %v2660
    %v2779 = vpack.c.b16 %v2663, %v2662
    %v2780 = vpack.c.b16 %v2665, %v2664
    %v2781 = vpack.c.b16 %v2667, %v2666
    %v2782 = vpack.c.b16 %v2669, %v2668
    %v2783 = vpack.c.b16 %v2671, %v2670
    %v2784 = vpack.c.b16 %v2673, %v2672
    %v2785 = vpack.c.b16 %v2675, %v2674
    %v2786 = vpack.c.b16 %v2677, %v2676
    %v2787 = vpack.c.b16 %v2679, %v2678
    %v2788 = vpack.c.b16 %v2681, %v2680
    %v2789 = vpack.c.b16 %v2683, %v2682
    %v2790 = vpack.c.b16 %v2685, %v2684
    %v2791 = vpack.c.b16 %v2687, %v2686
    %v2792 = vpack.c.b16 %v2689, %v2688
    %v2793 = vpack.c.b16 %v2691, %v2690
    %v2794 = vpack.c.b16 %v2693, %v2692
    %v2795 = vpack.c.b16 %v2695, %v2694
    %v2796 = vpack.c.b16 %v2697, %v2696
    %v2797 = vpack.c.b16 %v2699, %v2698
    %v2798 = vpack.c.b16 %v2701, %v2700
    %v2799 = vpack.c.b16 %v2703, %v2702
    %v2800 = vpack.c.b16 %v2705, %v2704
    %v2801 = vpack.c.b16 %v2707, %v2706
    %v2802 = vpack.c.b16 %v2709, %v2708
    %v2803 = vpack.c.b16 %v2711, %v2710
    %v2804 = vpack.c.b16 %v2713, %v2712
    %v2805 = vpack.c.b16 %v2715, %v2714
    %v2806 = vpack.c.b16 %v2717, %v2716
    %v2807 = vpack.c.b16 %v2719, %v2718
    %v2808 = vpack.c.b16 %v2721, %v2720
    %v2809 = vpack.c.b16 %v2723, %v2722
    %v2810 = vpack.c.b16 %v2725, %v2724
    %v2811 = vpack.c.b16 %v2727, %v2726
    %v2812 = vpack.c.b16 %v2729, %v2728
    %v2813 = vpack.c.b16 %v2731, %v2730
    %v2814 = vpack.c.b16 %v2733, %v2732
    %v2815 = vpack.c.b16 %v2735, %v2734
    %v2816 = vpack.c.b16 %v2737, %v2736
    %v2817 = vpack.c.b16 %v2739, %v2738
    %v2818 = vpack.c.b16 %v2741, %v2740
    %v2819 = vpack.c.b16 %v2743, %v2742
    %v2820 = vpack.c.b16 %v2745, %v2744
    %v2821 = vpack.c.b16 %v2747, %v2746
    %v2822 = vpack.c.b16 %v2749, %v2748
    %v2823 = vpack.c.b16 %v2751, %v2750
    %v2824 = vpack.c.b16 %v2753, %v2752
    %v2825 = vpack.c.b16 %v2755, %v2754
    %v2826 = vpack.c.b16 %v2757, %v2756
    %v2827 = vpack.c.b16 %v2759, %v2758
    %v2828 = vpack.c.b16 %v2761, %v2760
    %v2829 = vpack.c.b16 %v2763, %v2762
    %v2830 = vpack.c.b16 %v2765, %v2764
    %v2831 = vpack.c.b16 %v2767, %v2766
    %2896 = vmatprep.subr.bf16.mxu0 0
    %2897 = vmatpush1.bf16.msra.mxu0 %v2768
    %2898 = vmatprep.subr.bf16.mxu0 0
    %2899 = vmatpush1.bf16.msra.mxu0 %v2769
    %2900 = vmatprep.subr.bf16.mxu0 0
    %2901 = vmatpush1.bf16.msra.mxu0 %v2770
    %2902 = vmatprep.subr.bf16.mxu0 0
    %2903 = vmatpush1.bf16.msra.mxu0 %v2771
    %2904 = vmatprep.subr.bf16.mxu0 0
    %2905 = vmatpush1.bf16.msra.mxu0 %v2772
    %2906 = vmatprep.subr.bf16.mxu0 0
    %2907 = vmatpush1.bf16.msra.mxu0 %v2773
    %2908 = vmatprep.subr.bf16.mxu0 0
    %2909 = vmatpush1.bf16.msra.mxu0 %v2774
    %2910 = vmatprep.subr.bf16.mxu0 0
    %2911 = vmatpush1.bf16.msra.mxu0 %v2775
    %2912 = vmatprep.subr.bf16.mxu0 0
    %2913 = vmatpush1.bf16.msra.mxu0 %v2776
    %2914 = vmatprep.subr.bf16.mxu0 0
    %2915 = vmatpush1.bf16.msra.mxu0 %v2777
    %2916 = vmatprep.subr.bf16.mxu0 0
    %2917 = vmatpush1.bf16.msra.mxu0 %v2778
    %2918 = vmatprep.subr.bf16.mxu0 0
    %2919 = vmatpush1.bf16.msra.mxu0 %v2779
    %2920 = vmatprep.subr.bf16.mxu0 0
    %2921 = vmatpush1.bf16.msra.mxu0 %v2780
    %2922 = vmatprep.subr.bf16.mxu0 0
    %2923 = vmatpush1.bf16.msra.mxu0 %v2781
    %2924 = vmatprep.subr.bf16.mxu0 0
    %2925 = vmatpush1.bf16.msra.mxu0 %v2782
    %2926 = vmatprep.subr.bf16.mxu0 0
    %2927 = vmatpush1.bf16.msra.mxu0 %v2783
    %2928 = vmatprep.mubr.bf16.mxu0 %v2362
    %2929 = vmatmul.mubr.bf16.gmra.mrb[0].mxu0 %v2361
    %v2930 = vpop.f32.mrb[0].mxu0
    %v2931 = vadd.f32 %v2510, %v2930
    %v2932 = vpop.f32.mrb[0].mxu0
    %v2933 = vpop.f32.mrb[0].mxu0
    %v2934 = vadd.f32 %v2510, %v2933
    %v2935 = vpop.f32.mrb[0].mxu0
    %2936 = vmatprep.mubr.bf16.mxu0 %v2370
    %2937 = vmatmul.mubr.bf16.gmra.mrb[0].mxu0 %v2369
    %v2938 = vpop.f32.mrb[0].mxu0
    %v2939 = vadd.f32 %v2510, %v2938
    %v2940 = vpop.f32.mrb[0].mxu0
    %v2941 = vpop.f32.mrb[0].mxu0
    %v2942 = vpop.f32.mrb[0].mxu0
    %2943 = vdwg.mxu0
    %2944 = vmatprep.subr.bf16.mxu0 0
    %2945 = vmatpush1.bf16.msra.mxu0 %v2784
    %2946 = vmatprep.subr.bf16.mxu0 0
    %2947 = vmatpush1.bf16.msra.mxu0 %v2785
    %2948 = vmatprep.subr.bf16.mxu0 0
    %2949 = vmatpush1.bf16.msra.mxu0 %v2786
    %2950 = vmatprep.subr.bf16.mxu0 0
    %2951 = vmatpush1.bf16.msra.mxu0 %v2787
    %2952 = vmatprep.subr.bf16.mxu0 0
    %2953 = vmatpush1.bf16.msra.mxu0 %v2788
    %2954 = vmatprep.subr.bf16.mxu0 0
    %2955 = vmatpush1.bf16.msra.mxu0 %v2789
    %2956 = vmatprep.subr.bf16.mxu0 0
    %2957 = vmatpush1.bf16.msra.mxu0 %v2790
    %2958 = vmatprep.subr.bf16.mxu0 0
    %2959 = vmatpush1.bf16.msra.mxu0 %v2791
    %2960 = vmatprep.subr.bf16.mxu0 0
    %2961 = vmatpush1.bf16.msra.mxu0 %v2792
    %2962 = vmatprep.subr.bf16.mxu0 0
    %2963 = vmatpush1.bf16.msra.mxu0 %v2793
    %2964 = vmatprep.subr.bf16.mxu0 0
    %2965 = vmatpush1.bf16.msra.mxu0 %v2794
    %2966 = vmatprep.subr.bf16.mxu0 0
    %2967 = vmatpush1.bf16.msra.mxu0 %v2795
    %2968 = vmatprep.subr.bf16.mxu0 0
    %2969 = vmatpush1.bf16.msra.mxu0 %v2796
    %2970 = vmatprep.subr.bf16.mxu0 0
    %2971 = vmatpush1.bf16.msra.mxu0 %v2797
    %2972 = vmatprep.subr.bf16.mxu0 0
    %2973 = vmatpush1.bf16.msra.mxu0 %v2798
    %2974 = vmatprep.subr.bf16.mxu0 0
    %2975 = vmatpush1.bf16.msra.mxu0 %v2799
    %2976 = vmatprep.mubr.bf16.mxu0 %v2364
    %2977 = vmatmul.mubr.bf16.gmra.mrb[0].mxu0 %v2363
    %v2978 = vpop.f32.mrb[0].mxu0
    %v2979 = vadd.f32 %v2931, %v2978
    %v2980 = vpop.f32.mrb[0].mxu0
    %v2981 = vpop.f32.mrb[0].mxu0
    %v2982 = vadd.f32 %v2934, %v2981
    %v2983 = vpop.f32.mrb[0].mxu0
    %2984 = vmatprep.mubr.bf16.mxu0 %v2372
    %2985 = vmatmul.mubr.bf16.gmra.mrb[0].mxu0 %v2371
    %v2986 = vpop.f32.mrb[0].mxu0
    %v2987 = vadd.f32 %v2939, %v2986
    %v2988 = vpop.f32.mrb[0].mxu0
    %v2989 = vpop.f32.mrb[0].mxu0
    %v2990 = vpop.f32.mrb[0].mxu0
    %2991 = vdwg.mxu0
    %2992 = vmatprep.subr.bf16.mxu0 0
    %2993 = vmatpush1.bf16.msra.mxu0 %v2800
    %2994 = vmatprep.subr.bf16.mxu0 0
    %2995 = vmatpush1.bf16.msra.mxu0 %v2801
    %2996 = vmatprep.subr.bf16.mxu0 0
    %2997 = vmatpush1.bf16.msra.mxu0 %v2802
    %2998 = vmatprep.subr.bf16.mxu0 0
    %2999 = vmatpush1.bf16.msra.mxu0 %v2803
    %3000 = vmatprep.subr.bf16.mxu0 0
    %3001 = vmatpush1.bf16.msra.mxu0 %v2804
    %3002 = vmatprep.subr.bf16.mxu0 0
    %3003 = vmatpush1.bf16.msra.mxu0 %v2805
    %3004 = vmatprep.subr.bf16.mxu0 0
    %3005 = vmatpush1.bf16.msra.mxu0 %v2806
    %3006 = vmatprep.subr.bf16.mxu0 0
    %3007 = vmatpush1.bf16.msra.mxu0 %v2807
    %3008 = vmatprep.subr.bf16.mxu0 0
    %3009 = vmatpush1.bf16.msra.mxu0 %v2808
    %3010 = vmatprep.subr.bf16.mxu0 0
    %3011 = vmatpush1.bf16.msra.mxu0 %v2809
    %3012 = vmatprep.subr.bf16.mxu0 0
    %3013 = vmatpush1.bf16.msra.mxu0 %v2810
    %3014 = vmatprep.subr.bf16.mxu0 0
    %3015 = vmatpush1.bf16.msra.mxu0 %v2811
    %3016 = vmatprep.subr.bf16.mxu0 0
    %3017 = vmatpush1.bf16.msra.mxu0 %v2812
    %3018 = vmatprep.subr.bf16.mxu0 0
    %3019 = vmatpush1.bf16.msra.mxu0 %v2813
    %3020 = vmatprep.subr.bf16.mxu0 0
    %3021 = vmatpush1.bf16.msra.mxu0 %v2814
    %3022 = vmatprep.subr.bf16.mxu0 0
    %3023 = vmatpush1.bf16.msra.mxu0 %v2815
    %3024 = vmatprep.mubr.bf16.mxu0 %v2366
    %3025 = vmatmul.mubr.bf16.gmra.mrb[0].mxu0 %v2365
    %v3026 = vpop.f32.mrb[0].mxu0
    %v3027 = vadd.f32 %v2979, %v3026
    %v3028 = vpop.f32.mrb[0].mxu0
    %v3029 = vpop.f32.mrb[0].mxu0
    %v3030 = vadd.f32 %v2982, %v3029
    %v3031 = vpop.f32.mrb[0].mxu0
    %3032 = vmatprep.mubr.bf16.mxu0 %v2374
    %3033 = vmatmul.mubr.bf16.gmra.mrb[0].mxu0 %v2373
    %v3034 = vpop.f32.mrb[0].mxu0
    %v3035 = vadd.f32 %v2987, %v3034
    %v3036 = vpop.f32.mrb[0].mxu0
    %v3037 = vpop.f32.mrb[0].mxu0
    %v3038 = vpop.f32.mrb[0].mxu0
    %3039 = vdwg.mxu0
    %3040 = vmatprep.subr.bf16.mxu0 0
    %3041 = vmatpush1.bf16.msra.mxu0 %v2816
    %3042 = vmatprep.subr.bf16.mxu0 0
    %3043 = vmatpush1.bf16.msra.mxu0 %v2817
    %3044 = vmatprep.subr.bf16.mxu0 0
    %3045 = vmatpush1.bf16.msra.mxu0 %v2818
    %3046 = vmatprep.subr.bf16.mxu0 0
    %3047 = vmatpush1.bf16.msra.mxu0 %v2819
    %3048 = vmatprep.subr.bf16.mxu0 0
    %3049 = vmatpush1.bf16.msra.mxu0 %v2820
    %3050 = vmatprep.subr.bf16.mxu0 0
    %3051 = vmatpush1.bf16.msra.mxu0 %v2821
    %3052 = vmatprep.subr.bf16.mxu0 0
    %3053 = vmatpush1.bf16.msra.mxu0 %v2822
    %3054 = vmatprep.subr.bf16.mxu0 0
    %3055 = vmatpush1.bf16.msra.mxu0 %v2823
    %3056 = vmatprep.subr.bf16.mxu0 0
    %3057 = vmatpush1.bf16.msra.mxu0 %v2824
    %3058 = vmatprep.subr.bf16.mxu0 0
    %3059 = vmatpush1.bf16.msra.mxu0 %v2825
    %3060 = vmatprep.subr.bf16.mxu0 0
    %3061 = vmatpush1.bf16.msra.mxu0 %v2826
    %3062 = vmatprep.subr.bf16.mxu0 0
    %3063 = vmatpush1.bf16.msra.mxu0 %v2827
    %3064 = vmatprep.subr.bf16.mxu0 0
    %3065 = vmatpush1.bf16.msra.mxu0 %v2828
    %3066 = vmatprep.subr.bf16.mxu0 0
    %3067 = vmatpush1.bf16.msra.mxu0 %v2829
    %3068 = vmatprep.subr.bf16.mxu0 0
    %3069 = vmatpush1.bf16.msra.mxu0 %v2830
    %3070 = vmatprep.subr.bf16.mxu0 0
    %3071 = vmatpush1.bf16.msra.mxu0 %v2831
    %3072 = vmatprep.mubr.bf16.mxu0 %v2368
    %3073 = vmatmul.mubr.bf16.gmra.mrb[0].mxu0 %v2367
    %v3074 = vpop.f32.mrb[0].mxu0
    %v3075 = vadd.f32 %v3027, %v3074
    %v3076 = vpop.f32.mrb[0].mxu0
    %v3077 = vpop.f32.mrb[0].mxu0
    %v3078 = vadd.f32 %v3030, %v3077
    %v3079 = vpop.f32.mrb[0].mxu0
    %3080 = vmatprep.mubr.bf16.mxu0 %v2376
    %3081 = vmatmul.mubr.bf16.gmra.mrb[0].mxu0 %v2375
    %v3082 = vpop.f32.mrb[0].mxu0
    %v3083 = vadd.f32 %v3035, %v3082
    %v3084 = vpop.f32.mrb[0].mxu0
    %v3085 = vpop.f32.mrb[0].mxu0
    %v3086 = vpop.f32.mrb[0].mxu0
    %3087 = vdwg.mxu0
    %v3088 = vmax.f32 %v3075, 0.0
    %v3089 = vmax.f32 %v3078, 0.0
    %v3090 = vmax.f32 %v3083, 0.0
    %v3091 = vpack.c.bf16 %v3089, %v3088
    %v3092 = vpack.c.bf16 %v3090, %v3090
    %v3093 = vld [vmem:[%s9] sm:$0xf]
    %v3094 = vld [vmem:[%s9 + $0x4] sm:$0xf]
    %v3095 = vld [vmem:[%s9 + $0x8] sm:$0xf]
    %v3096 = vld [vmem:[%s9 + $0xc] sm:$0xf]
    %v3097 = vld [vmem:[%s9 + $0x10] sm:$0xf]
    %v3098 = vld [vmem:[%s9 + $0x14] sm:$0xf]
    %v3099 = vld [vmem:[%s9 + $0x18] sm:$0xf]
    %v3100 = vld [vmem:[%s9 + $0x1c] sm:$0xf]
    %v3101 = vld [vmem:[%s10] sm:$0x1]
    %v3103 = vlaneseq
    %v3104 = vshrl.u32 %v3103, 7
    %v3105 = vsub.s32 0, %v3104
    %v3106 = vrot.slane %v3101, %v3105
    %v3116 = vunpack.c.l.b16 %v3093
    %v3117 = vunpack.c.l.b16 %v3094
    %v3118 = vunpack.c.l.b16 %v3095
    %v3119 = vunpack.c.l.b16 %v3096
    %v3120 = vunpack.c.l.b16 %v3097
    %v3121 = vunpack.c.l.b16 %v3098
    %v3122 = vunpack.c.l.b16 %v3099
    %v3123 = vunpack.c.l.b16 %v3100
    %v3124 = vpack.c.b16 %v3117, %v3116
    %v3125 = vpack.c.b16 %v3119, %v3118
    %v3126 = vpack.c.b16 %v3121, %v3120
    %v3127 = vpack.c.b16 %v3123, %v3122
    %vm3132 = vcmask 523264
    %v3134 = vsel %vm3132, %v3091, 0
    %v3137 = vsel %vm3132, %v3092, 0
    %3139 = vmatprep.subr.bf16.mxu0 0
    %3140 = vmatpush1.bf16.msra.mxu0 %v3124
    %3141 = vmatprep.subr.bf16.mxu0 0
    %3142 = vmatpush1.bf16.msra.mxu0 %v3125
    %3143 = vmatprep.subr.bf16.mxu0 0
    %3144 = vmatpush1.bf16.msra.mxu0 %v3126
    %3145 = vmatprep.subr.bf16.mxu0 0
    %3146 = vmatpush1.bf16.msra.mxu0 %v3127
    %3147 = vmatprep.subr.bf16.mxu0 0
    %3148 = vmatpush1.bf16.msra.mxu0 0
    %3149 = vmatprep.subr.bf16.mxu0 0
    %3150 = vmatpush1.bf16.msra.mxu0 0
    %3151 = vmatprep.subr.bf16.mxu0 0
    %3152 = vmatpush1.bf16.msra.mxu0 0
    %3153 = vmatprep.subr.bf16.mxu0 0
    %3154 = vmatpush1.bf16.msra.mxu0 0
    %3155 = vmatprep.subr.bf16.mxu0 0
    %3156 = vmatpush1.bf16.msra.mxu0 0
    %3157 = vmatprep.subr.bf16.mxu0 0
    %3158 = vmatpush1.bf16.msra.mxu0 0
    %3159 = vmatprep.subr.bf16.mxu0 0
    %3160 = vmatpush1.bf16.msra.mxu0 0
    %3161 = vmatprep.subr.bf16.mxu0 0
    %3162 = vmatpush1.bf16.msra.mxu0 0
    %3163 = vmatprep.subr.bf16.mxu0 0
    %3164 = vmatpush1.bf16.msra.mxu0 0
    %3165 = vmatprep.subr.bf16.mxu0 0
    %3166 = vmatpush1.bf16.msra.mxu0 0
    %3167 = vmatprep.subr.bf16.mxu0 0
    %3168 = vmatpush1.bf16.msra.mxu0 0
    %3169 = vmatprep.subr.bf16.mxu0 0
    %3170 = vmatpush1.bf16.msra.mxu0 0
    %3171 = vmatprep.mubr.bf16.mxu0 0
    %3172 = vmatmul.mubr.bf16.gmra.mrb[0].mxu0 %v3134
    %v3173 = vpop.f32.mrb[0].mxu0
    %v3174 = vadd.f32 %v3106, %v3173
    %v3175 = vpop.f32.mrb[0].mxu0
    %v3176 = vpop.f32.mrb[0].mxu0
    %v3177 = vadd.f32 %v3106, %v3176
    %v3178 = vpop.f32.mrb[0].mxu0
    %3179 = vmatprep.mubr.bf16.mxu0 0
    %3180 = vmatmul.mubr.bf16.gmra.mrb[0].mxu0 %v3137
    %v3181 = vpop.f32.mrb[0].mxu0
    %v3182 = vadd.f32 %v3106, %v3181
    %v3183 = vpop.f32.mrb[0].mxu0
    %v3184 = vpop.f32.mrb[0].mxu0
    %v3185 = vpop.f32.mrb[0].mxu0
    %3186 = vdwg.mxu0
    %3187 = vst [vmem:[%s11] sm:$0xff] %v3174
    %3188 = vst [vmem:[%s11 + $0x8] sm:$0xff] %v3177
    %3189 = vst [vmem:[%s11 + $0x10] sm:$0x1] %v3182
    // Predicated region
    $region50: #{cnn_forward.1} parent=1 // pred_check
      _
    $region51: #{cnn_forward.1} parent=1 // pred_check_branch
      %3191 = sbr.rel (0) target = $region53
    $region52: #{cnn_forward.1} parent=1 // pred_region
      _
    $region53: #{cnn_forward.1} parent=1 // pred_fallthru
      _
    // Predicated region
    $region54: #{cnn_forward.1} parent=1 // pred_check
      _
    $region55: #{cnn_forward.1} parent=1 // pred_check_branch
      %3193 = sbr.rel (0) target = $region57
    $region56: #{cnn_forward.1} parent=1 // pred_region
      _
    $region57: #{cnn_forward.1} parent=1 // pred_fallthru
      _
    %3194 = vsyncpa [#allocation3], 1

</llo_original>
